<compile_context>
chip_gen: v5e
topology: v5e:2x2
jax: 0.10.0
libtpu: 0.0.40
codegen_flags: <defaults>
</compile_context>

<pallas_src>
import functools

import jax
import jax.numpy as jnp
from jax import lax
from jax.experimental import pallas as pl
from jax.experimental.pallas import tpu as pltpu

EPS = 1e-5


def _round_up(a, b):
    return (a + b - 1) // b * b


# ----------------------------- Pallas kernel ------------------------------- #

def make_encode_asp_kernel(T, n_cw, Cin_pad, tap_offsets_flat):
    """tap_offsets_flat: static flat column offsets, branch-major then (kh,kw)."""

    def kernel(x_ref, w3_ref, s3_ref, b3_ref, w1_ref, s1_ref, b1_ref,
               o_ref, win_ref, stack_ref):
        # x_ref     : (n_chunks, Cin_pad, T) bf16  all T-column chunks of this batch's
        #                                          padded, channels-first, flat input
        # w3_ref    : (4*Cout, 4*9*Cin_pad)  bf16  block-diagonal fused 3x3 weights
        # s3_ref    : (4*Cout, 1)            f32   folded BN scale (branch-major)
        # b3_ref    : (4*Cout, 1)            f32   folded BN bias  (incl. conv bias)
        # w1_ref    : (Cout, 4*Cout)         f32   concat + 1x1 conv weight
        # s1_ref    : (Cout, 1), b1_ref: (Cout, 1) f32 folded BN for the 1x1 conv
        # o_ref     : (Cout, T)              bf16  lane-dense output tile
        # win_ref   : (Cin_pad, n_cw*T)      bf16  scratch: contiguous halo window
        # stack_ref : (4*9*Cin_pad, T)       bf16  scratch: stacked tap operand
        j = pl.program_id(1)

        # 1) Assemble the halo window [j*T, j*T + n_cw*T) from n_cw consecutive
        #    chunks.  Only the *leading* (untiled) dim is indexed dynamically.
        for kk in range(n_cw):
            win_ref[:, kk * T:(kk + 1) * T] = x_ref[j + kk]

        # 2) Build the (4*9*Cin_pad, T) tap stack: each tap is a static,
        #    constant-offset lane slice of the window (Cin_pad is a multiple of
        #    the bf16 sublane packing, so every store is tile-aligned).
        for idx, off in enumerate(tap_offsets_flat):
            stack_ref[idx * Cin_pad:(idx + 1) * Cin_pad, :] = win_ref[:, off:off + T]

        # 3) All four dilated 3x3 convs as ONE block-diagonal matmul.
        h = jnp.dot(w3_ref[...], stack_ref[...],
                    preferred_element_type=jnp.float32)            # (4*Cout, T)
        h = jnp.maximum(h * s3_ref[...] + b3_ref[...], 0.0)        # BN + ReLU (f32)

        # 4) concat(h0..h3) @ W1x1 == one K = 4*Cout contraction (kept f32).
        y = jnp.dot(w1_ref[...], h, preferred_element_type=jnp.float32)   # (Cout, T)
        y = jnp.maximum(y * s1_ref[...] + b1_ref[...], 0.0)
        o_ref[...] = y.astype(o_ref.dtype)

    return kernel


def encode_asp_pallas(x_chunks, w3f, s3, b3, w1, s1, b1,
                      *, T, n_cw, n_tiles, tap_offsets):
    N, n_chunks, Cin_pad, _ = x_chunks.shape
    Cout4, K3 = w3f.shape
    Cout = w1.shape[0]
    Cin = K3 // (len(tap_offsets))          # padded per-tap channel count
    HWp_pad = n_tiles * T

    kernel = make_encode_asp_kernel(T, n_cw, Cin_pad, tap_offsets)

    # Real (non-zero-padded) arithmetic: 4 branches of 9-tap conv + the 1x1.
    n_branch = Cout4 // Cout
    flops = 2 * N * HWp_pad * (n_branch * 9 * Cin_pad * Cout + Cout4 * Cout)
    bytes_accessed = (x_chunks.size * x_chunks.dtype.itemsize
                      + w3f.size * w3f.dtype.itemsize
                      + w1.size * w1.dtype.itemsize
                      + 4 * (s3.size + b3.size + s1.size + b1.size)
                      + 2 * N * Cout * HWp_pad)

    return pl.pallas_call(
        kernel,
        out_shape=jax.ShapeDtypeStruct((N, Cout, HWp_pad), jnp.bfloat16),
        grid_spec=pltpu.PrefetchScalarGridSpec(
            num_scalar_prefetch=0,
            grid=(N, n_tiles),
            in_specs=[
                # full per-batch chunked input stays resident across the j axis
                pl.BlockSpec((pl.Squeezed(), n_chunks, Cin_pad, T),
                             lambda n, j: (n, 0, 0, 0)),
                pl.BlockSpec((Cout4, K3), lambda n, j: (0, 0)),
                pl.BlockSpec((Cout4, 1), lambda n, j: (0, 0)),
                pl.BlockSpec((Cout4, 1), lambda n, j: (0, 0)),
                pl.BlockSpec((Cout, Cout4), lambda n, j: (0, 0)),
                pl.BlockSpec((Cout, 1), lambda n, j: (0, 0)),
                pl.BlockSpec((Cout, 1), lambda n, j: (0, 0)),
            ],
            out_specs=pl.BlockSpec((pl.Squeezed(), Cout, T),
                                   lambda n, j: (n, 0, j)),
            scratch_shapes=[
                pltpu.VMEM((Cin_pad, n_cw * T), jnp.bfloat16),   # halo window
                pltpu.VMEM((K3, T), jnp.bfloat16),               # tap stack
            ],
        ),
        compiler_params=pltpu.CompilerParams(
            dimension_semantics=("parallel", "parallel"),
            vmem_limit_bytes=32 * 1024 * 1024),   # explicit, portable across v5e/v6e/v7x
        cost_estimate=pl.CostEstimate(
            flops=flops, transcendentals=0, bytes_accessed=bytes_accessed),
    )(x_chunks, w3f, s3, b3, w1, s1, b1)


# ------------------------------- JAX glue ----------------------------------- #

@functools.partial(jax.jit, static_argnums=2)
def encode_asp_forward(x_nchw, params, dils):
    """Full Encode_ASP forward. Input/output are NCHW (PyTorch convention)."""
    x = x_nchw.astype(jnp.float32)
    N, Cin, H, W = x.shape
    Cout = params["w3"].shape[-1]
    nb = len(dils)

    maxd = max(dils)
    Hp, Wp = H + 2 * maxd, W + 2 * maxd
    HWp = Hp * Wp
    margin = maxd * (Wp + 1)            # max |flat tap shift| over all branches

    # Lane-aligned spatial tiling of the flattened padded space.
    T = 256 if HWp <= 4096 else 1024    # lane tile (multiple of 128)
    assert T % 128 == 0
    n_tiles = pl.cdiv(HWp, T)
    HWp_pad = n_tiles * T
    n_halo = pl.cdiv(2 * margin, T)     # extra chunks needed to cover the halo
    n_cw = n_halo + 1                   # chunks per in-kernel window
    n_chunks = n_tiles + n_halo
    L = n_chunks * T

    Cin_pad = _round_up(Cin, 16)        # bf16 sublane packing -> aligned stack writes

    # Zero-pad spatially once (covers SAME padding of every dilation), pad the
    # channel dim to Cin_pad, flatten the spatial dims, add a flat left margin
    # so each tap is a non-negative static lane offset, and chunk the flat axis.
    xb = x.astype(jnp.bfloat16)
    xp = jnp.pad(xb, ((0, 0), (0, Cin_pad - Cin), (maxd, maxd), (maxd, maxd)))
    x_flat = jnp.pad(xp.reshape(N, Cin_pad, HWp),
                     ((0, 0), (0, 0), (margin, L - margin - HWp)))
    x_chunks = x_flat.reshape(N, Cin_pad, n_chunks, T).transpose(0, 2, 1, 3)

    # Static flat offsets, branch-major then (kh, kw): matches the weight packing.
    tap_offsets = tuple(margin + (kh - 1) * d * Wp + (kw - 1) * d
                        for d in dils for kh in range(3) for kw in range(3))

    # Fold eval-mode BatchNorm (+ conv bias) into per-channel scale / bias.
    s3 = params["gamma3"] / jnp.sqrt(params["var3"] + EPS)            # (4,Cout)
    b3 = params["beta3"] + (params["cb3"] - params["mean3"]) * s3     # (4,Cout)
    s1 = params["gamma1"] / jnp.sqrt(params["var1"] + EPS)            # (Cout,)
    b1 = params["beta1"] + (params["cb1"] - params["mean1"]) * s1     # (Cout,)

    # Block-diagonal fused 3x3 weight: (4*Cout, 4*9*Cin_pad), rows = concat order.
    Kb = 9 * Cin_pad
    w3p = jnp.pad(params["w3"],
                  ((0, 0), (0, 0), (0, 0), (0, Cin_pad - Cin), (0, 0)))
    w3p = w3p.transpose(0, 4, 1, 2, 3).reshape(nb, Cout, Kb)          # (b, co, t*cin)
    w3f = jnp.zeros((nb * Cout, nb * Kb), jnp.float32)
    for b in range(nb):
        w3f = w3f.at[b * Cout:(b + 1) * Cout, b * Kb:(b + 1) * Kb].set(w3p[b])

    w1t = params["w1"].T                                              # (Cout, 4*Cout)

    out = encode_asp_pallas(
        x_chunks,
        w3f.astype(jnp.bfloat16),
        s3.reshape(nb * Cout, 1).astype(jnp.float32),
        b3.reshape(nb * Cout, 1).astype(jnp.float32),
        w1t.astype(jnp.float32),
        s1.reshape(Cout, 1).astype(jnp.float32),
        b1.reshape(Cout, 1).astype(jnp.float32),
        T=T, n_cw=n_cw, n_tiles=n_tiles, tap_offsets=tap_offsets)     # (N,Cout,HWp_pad) bf16

    # Crop the central HxW region of the padded plane -> already NCHW.
    out = out[:, :, :HWp].reshape(N, Cout, Hp, Wp)[:, :, maxd:maxd + H, maxd:maxd + W]
    return out.astype(jnp.float32)


# --------------------------- pure-JAX reference ------------------------------ #

def reference_forward(x_nchw, params, dils):
    x = jnp.transpose(x_nchw, (0, 2, 3, 1)).astype(jnp.float32)   # NHWC
    hs = []
    for i, d in enumerate(dils):
        w = params["w3"][i]                                       # (3,3,Cin,Cout)
        z = lax.conv_general_dilated(
            x, w, window_strides=(1, 1), padding=((d, d), (d, d)),
            rhs_dilation=(d, d),
            dimension_numbers=("NHWC", "HWIO", "NHWC"),
            precision=lax.Precision.HIGHEST)
        z = z + params["cb3"][i]
        z = ((z - params["mean3"][i]) / jnp.sqrt(params["var3"][i] + EPS)
             * params["gamma3"][i] + params["beta3"][i])
        hs.append(jnp.maximum(z, 0.0))
    h = jnp.concatenate(hs, axis=-1)
    z = jnp.einsum("nhwc,cd->nhwd", h, params["w1"],
                   precision=lax.Precision.HIGHEST) + params["cb1"]
    z = ((z - params["mean1"]) / jnp.sqrt(params["var1"] + EPS)
         * params["gamma1"] + params["beta1"])
    z = jnp.maximum(z, 0.0)
    return jnp.transpose(z, (0, 3, 1, 2))                         # NCHW


# --------------------------------- main -------------------------------------- #

if __name__ == "__main__":
    key = jax.random.PRNGKey(0)
    N, Cin, H, W = 2, 4, 16, 16
    Cout = 8
    dilation, rates = 1, [1, 2, 3, 4]
    dils = tuple(int(dilation * r) for r in rates)

    ks = jax.random.split(key, 14)
    params = {
        # 3x3 conv weights, HWIO per branch: (4, 3, 3, Cin, Cout)
        "w3":     0.1 * jax.random.normal(ks[0], (4, 3, 3, Cin, Cout), jnp.float32),
        "cb3":    0.1 * jax.random.normal(ks[1], (4, Cout), jnp.float32),
        "gamma3": jax.random.uniform(ks[2], (4, Cout), jnp.float32, 0.5, 1.5),
        "beta3":  0.1 * jax.random.normal(ks[3], (4, Cout), jnp.float32),
        "mean3":  0.1 * jax.random.normal(ks[4], (4, Cout), jnp.float32),
        "var3":   jax.random.uniform(ks[5], (4, Cout), jnp.float32, 0.5, 1.5),
        # 1x1 conv weight laid out (in=4*Cout, out=Cout)
        "w1":     0.1 * jax.random.normal(ks[6], (4 * Cout, Cout), jnp.float32),
        "cb1":    0.1 * jax.random.normal(ks[7], (Cout,), jnp.float32),
        "gamma1": jax.random.uniform(ks[8], (Cout,), jnp.float32, 0.5, 1.5),
        "beta1":  0.1 * jax.random.normal(ks[9], (Cout,), jnp.float32),
        "mean1":  0.1 * jax.random.normal(ks[10], (Cout,), jnp.float32),
        "var1":   jax.random.uniform(ks[11], (Cout,), jnp.float32, 0.5, 1.5),
    }

    x = jax.random.normal(ks[12], (N, Cin, H, W), jnp.float32)    # NCHW like PyTorch

    out = jax.block_until_ready(encode_asp_forward(x, params, dils))
    ref = jax.block_until_ready(reference_forward(x, params, dils))

    assert out.shape == (N, Cout, H, W), out.shape
    max_err = float(jnp.max(jnp.abs(out - ref)))
    # Tolerance covers the deliberate bf16 quantization of the input / 3x3
    # weights and the bf16 output store (accumulation, BN and the 1x1 conv
    # stay f32) vs the f32 HIGHEST-precision reference.
    assert max_err < 4e-2, f"mismatch vs reference: max abs err {max_err}"
    print("KERNEL_OK")
</pallas_src>

<mosaic_0001>
module attributes {stable_mosaic.version = 11 : i64} {
  func.func @kernel(%arg0: i32, %arg1: i32, %arg2: memref<1x4x16x256xbf16, #tpu.memory_space<vmem>>, %arg3: memref<32x576xbf16, #tpu.memory_space<vmem>>, %arg4: memref<32x1xf32, #tpu.memory_space<vmem>>, %arg5: memref<32x1xf32, #tpu.memory_space<vmem>>, %arg6: memref<8x32xf32, #tpu.memory_space<vmem>>, %arg7: memref<8x1xf32, #tpu.memory_space<vmem>>, %arg8: memref<8x1xf32, #tpu.memory_space<vmem>>, %arg9: memref<1x8x256xbf16, #tpu.memory_space<vmem>>, %arg10: memref<16x512xbf16, #tpu.memory_space<vmem>>, %arg11: memref<576x256xbf16, #tpu.memory_space<vmem>>) attributes {dimension_semantics = [#tpu.dimension_semantics<parallel>, #tpu.dimension_semantics<parallel>], iteration_bounds = array<i64: 2, 3>, scalar_prefetch = 0 : i64, scratch_operands = 2 : i64, tpu.core_type = #tpu.core_type<tc>, window_params = [{transform_indices = @transform_0, window_bounds = array<i64: 1, 4, 16, 256>}, {pipeline_mode = #tpu.pipeline_mode<synchronous>, transform_indices = @transform_1, window_bounds = array<i64: 32, 576>}, {pipeline_mode = #tpu.pipeline_mode<synchronous>, transform_indices = @transform_2, window_bounds = array<i64: 32, 1>}, {pipeline_mode = #tpu.pipeline_mode<synchronous>, transform_indices = @transform_3, window_bounds = array<i64: 32, 1>}, {pipeline_mode = #tpu.pipeline_mode<synchronous>, transform_indices = @transform_4, window_bounds = array<i64: 8, 32>}, {pipeline_mode = #tpu.pipeline_mode<synchronous>, transform_indices = @transform_5, window_bounds = array<i64: 8, 1>}, {pipeline_mode = #tpu.pipeline_mode<synchronous>, transform_indices = @transform_6, window_bounds = array<i64: 8, 1>}, {transform_indices = @transform_7, window_bounds = array<i64: 1, 8, 256>}]} {
    %c0_i32 = arith.constant 0 : i32
    %0 = arith.addi %arg1, %c0_i32 : i32
    %c0 = arith.constant 0 : index
    %1 = arith.index_cast %0 : i32 to index
    %c0_0 = arith.constant 0 : index
    %c0_1 = arith.constant 0 : index
    %2 = vector.load %arg2[%c0, %1, %c0_0, %c0_1] : memref<1x4x16x256xbf16, #tpu.memory_space<vmem>>, vector<1x1x16x256xbf16>
    %3 = vector.shape_cast %2 : vector<1x1x16x256xbf16> to vector<16x256xbf16>
    %c0_2 = arith.constant 0 : index
    %c0_3 = arith.constant 0 : index
    %4 = vector.load %arg10[%c0_2, %c0_3] : memref<16x512xbf16, #tpu.memory_space<vmem>>, vector<16x256xbf16>
    tpu.vector_store %arg10[%c0_2, %c0_3], %3 {strides = array<i32>} : memref<16x512xbf16, #tpu.memory_space<vmem>>, vector<16x256xbf16>,
    %c1_i32 = arith.constant 1 : i32
    %5 = arith.addi %arg1, %c1_i32 : i32
    %c0_4 = arith.constant 0 : index
    %6 = arith.index_cast %5 : i32 to index
    %c0_5 = arith.constant 0 : index
    %c0_6 = arith.constant 0 : index
    %7 = vector.load %arg2[%c0_4, %6, %c0_5, %c0_6] : memref<1x4x16x256xbf16, #tpu.memory_space<vmem>>, vector<1x1x16x256xbf16>
    %8 = vector.shape_cast %7 : vector<1x1x16x256xbf16> to vector<16x256xbf16>
    %c0_7 = arith.constant 0 : index
    %c256 = arith.constant 256 : index
    %9 = vector.load %arg10[%c0_7, %c256] : memref<16x512xbf16, #tpu.memory_space<vmem>>, vector<16x256xbf16>
    tpu.vector_store %arg10[%c0_7, %c256], %8 {strides = array<i32>} : memref<16x512xbf16, #tpu.memory_space<vmem>>, vector<16x256xbf16>,
    %c0_8 = arith.constant 0 : index
    %c75 = arith.constant 75 : index
    %10 = vector.load %arg10[%c0_8, %c75] : memref<16x512xbf16, #tpu.memory_space<vmem>>, vector<16x256xbf16>
    %c0_9 = arith.constant 0 : index
    %c0_10 = arith.constant 0 : index
    %11 = vector.load %arg11[%c0_9, %c0_10] : memref<576x256xbf16, #tpu.memory_space<vmem>>, vector<16x256xbf16>
    tpu.vector_store %arg11[%c0_9, %c0_10], %10 {strides = array<i32>} : memref<576x256xbf16, #tpu.memory_space<vmem>>, vector<16x256xbf16>,
    %c0_11 = arith.constant 0 : index
    %c76 = arith.constant 76 : index
    %12 = vector.load %arg10[%c0_11, %c76] : memref<16x512xbf16, #tpu.memory_space<vmem>>, vector<16x256xbf16>
    %c16 = arith.constant 16 : index
    %c0_12 = arith.constant 0 : index
    %13 = vector.load %arg11[%c16, %c0_12] : memref<576x256xbf16, #tpu.memory_space<vmem>>, vector<16x256xbf16>
    tpu.vector_store %arg11[%c16, %c0_12], %12 {strides = array<i32>} : memref<576x256xbf16, #tpu.memory_space<vmem>>, vector<16x256xbf16>,
    %c0_13 = arith.constant 0 : index
    %c77 = arith.constant 77 : index
    %14 = vector.load %arg10[%c0_13, %c77] : memref<16x512xbf16, #tpu.memory_space<vmem>>, vector<16x256xbf16>
    %c32 = arith.constant 32 : index
    %c0_14 = arith.constant 0 : index
    %15 = vector.load %arg11[%c32, %c0_14] : memref<576x256xbf16, #tpu.memory_space<vmem>>, vector<16x256xbf16>
    tpu.vector_store %arg11[%c32, %c0_14], %14 {strides = array<i32>} : memref<576x256xbf16, #tpu.memory_space<vmem>>, vector<16x256xbf16>,
    %c0_15 = arith.constant 0 : index
    %c99 = arith.constant 99 : index
    %16 = vector.load %arg10[%c0_15, %c99] : memref<16x512xbf16, #tpu.memory_space<vmem>>, vector<16x256xbf16>
    %c48 = arith.constant 48 : index
    %c0_16 = arith.constant 0 : index
    %17 = vector.load %arg11[%c48, %c0_16] : memref<576x256xbf16, #tpu.memory_space<vmem>>, vector<16x256xbf16>
    tpu.vector_store %arg11[%c48, %c0_16], %16 {strides = array<i32>} : memref<576x256xbf16, #tpu.memory_space<vmem>>, vector<16x256xbf16>,
    %c0_17 = arith.constant 0 : index
    %c100 = arith.constant 100 : index
    %18 = vector.load %arg10[%c0_17, %c100] : memref<16x512xbf16, #tpu.memory_space<vmem>>, vector<16x256xbf16>
    %c64 = arith.constant 64 : index
    %c0_18 = arith.constant 0 : index
    %19 = vector.load %arg11[%c64, %c0_18] : memref<576x256xbf16, #tpu.memory_space<vmem>>, vector<16x256xbf16>
    tpu.vector_store %arg11[%c64, %c0_18], %18 {strides = array<i32>} : memref<576x256xbf16, #tpu.memory_space<vmem>>, vector<16x256xbf16>,
    %c0_19 = arith.constant 0 : index
    %c101 = arith.constant 101 : index
    %20 = vector.load %arg10[%c0_19, %c101] : memref<16x512xbf16, #tpu.memory_space<vmem>>, vector<16x256xbf16>
    %c80 = arith.constant 80 : index
    %c0_20 = arith.constant 0 : index
    %21 = vector.load %arg11[%c80, %c0_20] : memref<576x256xbf16, #tpu.memory_space<vmem>>, vector<16x256xbf16>
    tpu.vector_store %arg11[%c80, %c0_20], %20 {strides = array<i32>} : memref<576x256xbf16, #tpu.memory_space<vmem>>, vector<16x256xbf16>,
    %c0_21 = arith.constant 0 : index
    %c123 = arith.constant 123 : index
    %22 = vector.load %arg10[%c0_21, %c123] : memref<16x512xbf16, #tpu.memory_space<vmem>>, vector<16x256xbf16>
    %c96 = arith.constant 96 : index
    %c0_22 = arith.constant 0 : index
    %23 = vector.load %arg11[%c96, %c0_22] : memref<576x256xbf16, #tpu.memory_space<vmem>>, vector<16x256xbf16>
    tpu.vector_store %arg11[%c96, %c0_22], %22 {strides = array<i32>} : memref<576x256xbf16, #tpu.memory_space<vmem>>, vector<16x256xbf16>,
    %c0_23 = arith.constant 0 : index
    %c124 = arith.constant 124 : index
    %24 = vector.load %arg10[%c0_23, %c124] : memref<16x512xbf16, #tpu.memory_space<vmem>>, vector<16x256xbf16>
    %c112 = arith.constant 112 : index
    %c0_24 = arith.constant 0 : index
    %25 = vector.load %arg11[%c112, %c0_24] : memref<576x256xbf16, #tpu.memory_space<vmem>>, vector<16x256xbf16>
    tpu.vector_store %arg11[%c112, %c0_24], %24 {strides = array<i32>} : memref<576x256xbf16, #tpu.memory_space<vmem>>, vector<16x256xbf16>,
    %c0_25 = arith.constant 0 : index
    %c125 = arith.constant 125 : index
    %26 = vector.load %arg10[%c0_25, %c125] : memref<16x512xbf16, #tpu.memory_space<vmem>>, vector<16x256xbf16>
    %c128 = arith.constant 128 : index
    %c0_26 = arith.constant 0 : index
    %27 = vector.load %arg11[%c128, %c0_26] : memref<576x256xbf16, #tpu.memory_space<vmem>>, vector<16x256xbf16>
    tpu.vector_store %arg11[%c128, %c0_26], %26 {strides = array<i32>} : memref<576x256xbf16, #tpu.memory_space<vmem>>, vector<16x256xbf16>,
    %c0_27 = arith.constant 0 : index
    %c50 = arith.constant 50 : index
    %28 = vector.load %arg10[%c0_27, %c50] : memref<16x512xbf16, #tpu.memory_space<vmem>>, vector<16x256xbf16>
    %c144 = arith.constant 144 : index
    %c0_28 = arith.constant 0 : index
    %29 = vector.load %arg11[%c144, %c0_28] : memref<576x256xbf16, #tpu.memory_space<vmem>>, vector<16x256xbf16>
    tpu.vector_store %arg11[%c144, %c0_28], %28 {strides = array<i32>} : memref<576x256xbf16, #tpu.memory_space<vmem>>, vector<16x256xbf16>,
    %c0_29 = arith.constant 0 : index
    %c52 = arith.constant 52 : index
    %30 = vector.load %arg10[%c0_29, %c52] : memref<16x512xbf16, #tpu.memory_space<vmem>>, vector<16x256xbf16>
    %c160 = arith.constant 160 : index
    %c0_30 = arith.constant 0 : index
    %31 = vector.load %arg11[%c160, %c0_30] : memref<576x256xbf16, #tpu.memory_space<vmem>>, vector<16x256xbf16>
    tpu.vector_store %arg11[%c160, %c0_30], %30 {strides = array<i32>} : memref<576x256xbf16, #tpu.memory_space<vmem>>, vector<16x256xbf16>,
    %c0_31 = arith.constant 0 : index
    %c54 = arith.constant 54 : index
    %32 = vector.load %arg10[%c0_31, %c54] : memref<16x512xbf16, #tpu.memory_space<vmem>>, vector<16x256xbf16>
    %c176 = arith.constant 176 : index
    %c0_32 = arith.constant 0 : index
    %33 = vector.load %arg11[%c176, %c0_32] : memref<576x256xbf16, #tpu.memory_space<vmem>>, vector<16x256xbf16>
    tpu.vector_store %arg11[%c176, %c0_32], %32 {strides = array<i32>} : memref<576x256xbf16, #tpu.memory_space<vmem>>, vector<16x256xbf16>,
    %c0_33 = arith.constant 0 : index
    %c98 = arith.constant 98 : index
    %34 = vector.load %arg10[%c0_33, %c98] : memref<16x512xbf16, #tpu.memory_space<vmem>>, vector<16x256xbf16>
    %c192 = arith.constant 192 : index
    %c0_34 = arith.constant 0 : index
    %35 = vector.load %arg11[%c192, %c0_34] : memref<576x256xbf16, #tpu.memory_space<vmem>>, vector<16x256xbf16>
    tpu.vector_store %arg11[%c192, %c0_34], %34 {strides = array<i32>} : memref<576x256xbf16, #tpu.memory_space<vmem>>, vector<16x256xbf16>,
    %c0_35 = arith.constant 0 : index
    %c100_36 = arith.constant 100 : index
    %36 = vector.load %arg10[%c0_35, %c100_36] : memref<16x512xbf16, #tpu.memory_space<vmem>>, vector<16x256xbf16>
    %c208 = arith.constant 208 : index
    %c0_37 = arith.constant 0 : index
    %37 = vector.load %arg11[%c208, %c0_37] : memref<576x256xbf16, #tpu.memory_space<vmem>>, vector<16x256xbf16>
    tpu.vector_store %arg11[%c208, %c0_37], %36 {strides = array<i32>} : memref<576x256xbf16, #tpu.memory_space<vmem>>, vector<16x256xbf16>,
    %c0_38 = arith.constant 0 : index
    %c102 = arith.constant 102 : index
    %38 = vector.load %arg10[%c0_38, %c102] : memref<16x512xbf16, #tpu.memory_space<vmem>>, vector<16x256xbf16>
    %c224 = arith.constant 224 : index
    %c0_39 = arith.constant 0 : index
    %39 = vector.load %arg11[%c224, %c0_39] : memref<576x256xbf16, #tpu.memory_space<vmem>>, vector<16x256xbf16>
    tpu.vector_store %arg11[%c224, %c0_39], %38 {strides = array<i32>} : memref<576x256xbf16, #tpu.memory_space<vmem>>, vector<16x256xbf16>,
    %c0_40 = arith.constant 0 : index
    %c146 = arith.constant 146 : index
    %40 = vector.load %arg10[%c0_40, %c146] : memref<16x512xbf16, #tpu.memory_space<vmem>>, vector<16x256xbf16>
    %c240 = arith.constant 240 : index
    %c0_41 = arith.constant 0 : index
    %41 = vector.load %arg11[%c240, %c0_41] : memref<576x256xbf16, #tpu.memory_space<vmem>>, vector<16x256xbf16>
    tpu.vector_store %arg11[%c240, %c0_41], %40 {strides = array<i32>} : memref<576x256xbf16, #tpu.memory_space<vmem>>, vector<16x256xbf16>,
    %c0_42 = arith.constant 0 : index
    %c148 = arith.constant 148 : index
    %42 = vector.load %arg10[%c0_42, %c148] : memref<16x512xbf16, #tpu.memory_space<vmem>>, vector<16x256xbf16>
    %c256_43 = arith.constant 256 : index
    %c0_44 = arith.constant 0 : index
    %43 = vector.load %arg11[%c256_43, %c0_44] : memref<576x256xbf16, #tpu.memory_space<vmem>>, vector<16x256xbf16>
    tpu.vector_store %arg11[%c256_43, %c0_44], %42 {strides = array<i32>} : memref<576x256xbf16, #tpu.memory_space<vmem>>, vector<16x256xbf16>,
    %c0_45 = arith.constant 0 : index
    %c150 = arith.constant 150 : index
    %44 = vector.load %arg10[%c0_45, %c150] : memref<16x512xbf16, #tpu.memory_space<vmem>>, vector<16x256xbf16>
    %c272 = arith.constant 272 : index
    %c0_46 = arith.constant 0 : index
    %45 = vector.load %arg11[%c272, %c0_46] : memref<576x256xbf16, #tpu.memory_space<vmem>>, vector<16x256xbf16>
    tpu.vector_store %arg11[%c272, %c0_46], %44 {strides = array<i32>} : memref<576x256xbf16, #tpu.memory_space<vmem>>, vector<16x256xbf16>,
    %c0_47 = arith.constant 0 : index
    %c25 = arith.constant 25 : index
    %46 = vector.load %arg10[%c0_47, %c25] : memref<16x512xbf16, #tpu.memory_space<vmem>>, vector<16x256xbf16>
    %c288 = arith.constant 288 : index
    %c0_48 = arith.constant 0 : index
    %47 = vector.load %arg11[%c288, %c0_48] : memref<576x256xbf16, #tpu.memory_space<vmem>>, vector<16x256xbf16>
    tpu.vector_store %arg11[%c288, %c0_48], %46 {strides = array<i32>} : memref<576x256xbf16, #tpu.memory_space<vmem>>, vector<16x256xbf16>,
    %c0_49 = arith.constant 0 : index
    %c28 = arith.constant 28 : index
    %48 = vector.load %arg10[%c0_49, %c28] : memref<16x512xbf16, #tpu.memory_space<vmem>>, vector<16x256xbf16>
    %c304 = arith.constant 304 : index
    %c0_50 = arith.constant 0 : index
    %49 = vector.load %arg11[%c304, %c0_50] : memref<576x256xbf16, #tpu.memory_space<vmem>>, vector<16x256xbf16>
    tpu.vector_store %arg11[%c304, %c0_50], %48 {strides = array<i32>} : memref<576x256xbf16, #tpu.memory_space<vmem>>, vector<16x256xbf16>,
    %c0_51 = arith.constant 0 : index
    %c31 = arith.constant 31 : index
    %50 = vector.load %arg10[%c0_51, %c31] : memref<16x512xbf16, #tpu.memory_space<vmem>>, vector<16x256xbf16>
    %c320 = arith.constant 320 : index
    %c0_52 = arith.constant 0 : index
    %51 = vector.load %arg11[%c320, %c0_52] : memref<576x256xbf16, #tpu.memory_space<vmem>>, vector<16x256xbf16>
    tpu.vector_store %arg11[%c320, %c0_52], %50 {strides = array<i32>} : memref<576x256xbf16, #tpu.memory_space<vmem>>, vector<16x256xbf16>,
    %c0_53 = arith.constant 0 : index
    %c97 = arith.constant 97 : index
    %52 = vector.load %arg10[%c0_53, %c97] : memref<16x512xbf16, #tpu.memory_space<vmem>>, vector<16x256xbf16>
    %c336 = arith.constant 336 : index
    %c0_54 = arith.constant 0 : index
    %53 = vector.load %arg11[%c336, %c0_54] : memref<576x256xbf16, #tpu.memory_space<vmem>>, vector<16x256xbf16>
    tpu.vector_store %arg11[%c336, %c0_54], %52 {strides = array<i32>} : memref<576x256xbf16, #tpu.memory_space<vmem>>, vector<16x256xbf16>,
    %c0_55 = arith.constant 0 : index
    %c100_56 = arith.constant 100 : index
    %54 = vector.load %arg10[%c0_55, %c100_56] : memref<16x512xbf16, #tpu.memory_space<vmem>>, vector<16x256xbf16>
    %c352 = arith.constant 352 : index
    %c0_57 = arith.constant 0 : index
    %55 = vector.load %arg11[%c352, %c0_57] : memref<576x256xbf16, #tpu.memory_space<vmem>>, vector<16x256xbf16>
    tpu.vector_store %arg11[%c352, %c0_57], %54 {strides = array<i32>} : memref<576x256xbf16, #tpu.memory_space<vmem>>, vector<16x256xbf16>,
    %c0_58 = arith.constant 0 : index
    %c103 = arith.constant 103 : index
    %56 = vector.load %arg10[%c0_58, %c103] : memref<16x512xbf16, #tpu.memory_space<vmem>>, vector<16x256xbf16>
    %c368 = arith.constant 368 : index
    %c0_59 = arith.constant 0 : index
    %57 = vector.load %arg11[%c368, %c0_59] : memref<576x256xbf16, #tpu.memory_space<vmem>>, vector<16x256xbf16>
    tpu.vector_store %arg11[%c368, %c0_59], %56 {strides = array<i32>} : memref<576x256xbf16, #tpu.memory_space<vmem>>, vector<16x256xbf16>,
    %c0_60 = arith.constant 0 : index
    %c169 = arith.constant 169 : index
    %58 = vector.load %arg10[%c0_60, %c169] : memref<16x512xbf16, #tpu.memory_space<vmem>>, vector<16x256xbf16>
    %c384 = arith.constant 384 : index
    %c0_61 = arith.constant 0 : index
    %59 = vector.load %arg11[%c384, %c0_61] : memref<576x256xbf16, #tpu.memory_space<vmem>>, vector<16x256xbf16>
    tpu.vector_store %arg11[%c384, %c0_61], %58 {strides = array<i32>} : memref<576x256xbf16, #tpu.memory_space<vmem>>, vector<16x256xbf16>,
    %c0_62 = arith.constant 0 : index
    %c172 = arith.constant 172 : index
    %60 = vector.load %arg10[%c0_62, %c172] : memref<16x512xbf16, #tpu.memory_space<vmem>>, vector<16x256xbf16>
    %c400 = arith.constant 400 : index
    %c0_63 = arith.constant 0 : index
    %61 = vector.load %arg11[%c400, %c0_63] : memref<576x256xbf16, #tpu.memory_space<vmem>>, vector<16x256xbf16>
    tpu.vector_store %arg11[%c400, %c0_63], %60 {strides = array<i32>} : memref<576x256xbf16, #tpu.memory_space<vmem>>, vector<16x256xbf16>,
    %c0_64 = arith.constant 0 : index
    %c175 = arith.constant 175 : index
    %62 = vector.load %arg10[%c0_64, %c175] : memref<16x512xbf16, #tpu.memory_space<vmem>>, vector<16x256xbf16>
    %c416 = arith.constant 416 : index
    %c0_65 = arith.constant 0 : index
    %63 = vector.load %arg11[%c416, %c0_65] : memref<576x256xbf16, #tpu.memory_space<vmem>>, vector<16x256xbf16>
    tpu.vector_store %arg11[%c416, %c0_65], %62 {strides = array<i32>} : memref<576x256xbf16, #tpu.memory_space<vmem>>, vector<16x256xbf16>,
    %c0_66 = arith.constant 0 : index
    %c0_67 = arith.constant 0 : index
    %64 = vector.load %arg10[%c0_66, %c0_67] : memref<16x512xbf16, #tpu.memory_space<vmem>>, vector<16x256xbf16>
    %c432 = arith.constant 432 : index
    %c0_68 = arith.constant 0 : index
    %65 = vector.load %arg11[%c432, %c0_68] : memref<576x256xbf16, #tpu.memory_space<vmem>>, vector<16x256xbf16>
    tpu.vector_store %arg11[%c432, %c0_68], %64 {strides = array<i32>} : memref<576x256xbf16, #tpu.memory_space<vmem>>, vector<16x256xbf16>,
    %c0_69 = arith.constant 0 : index
    %c4 = arith.constant 4 : index
    %66 = vector.load %arg10[%c0_69, %c4] : memref<16x512xbf16, #tpu.memory_space<vmem>>, vector<16x256xbf16>
    %c448 = arith.constant 448 : index
    %c0_70 = arith.constant 0 : index
    %67 = vector.load %arg11[%c448, %c0_70] : memref<576x256xbf16, #tpu.memory_space<vmem>>, vector<16x256xbf16>
    tpu.vector_store %arg11[%c448, %c0_70], %66 {strides = array<i32>} : memref<576x256xbf16, #tpu.memory_space<vmem>>, vector<16x256xbf16>,
    %c0_71 = arith.constant 0 : index
    %c8 = arith.constant 8 : index
    %68 = vector.load %arg10[%c0_71, %c8] : memref<16x512xbf16, #tpu.memory_space<vmem>>, vector<16x256xbf16>
    %c464 = arith.constant 464 : index
    %c0_72 = arith.constant 0 : index
    %69 = vector.load %arg11[%c464, %c0_72] : memref<576x256xbf16, #tpu.memory_space<vmem>>, vector<16x256xbf16>
    tpu.vector_store %arg11[%c464, %c0_72], %68 {strides = array<i32>} : memref<576x256xbf16, #tpu.memory_space<vmem>>, vector<16x256xbf16>,
    %c0_73 = arith.constant 0 : index
    %c96_74 = arith.constant 96 : index
    %70 = vector.load %arg10[%c0_73, %c96_74] : memref<16x512xbf16, #tpu.memory_space<vmem>>, vector<16x256xbf16>
    %c480 = arith.constant 480 : index
    %c0_75 = arith.constant 0 : index
    %71 = vector.load %arg11[%c480, %c0_75] : memref<576x256xbf16, #tpu.memory_space<vmem>>, vector<16x256xbf16>
    tpu.vector_store %arg11[%c480, %c0_75], %70 {strides = array<i32>} : memref<576x256xbf16, #tpu.memory_space<vmem>>, vector<16x256xbf16>,
    %c0_76 = arith.constant 0 : index
    %c100_77 = arith.constant 100 : index
    %72 = vector.load %arg10[%c0_76, %c100_77] : memref<16x512xbf16, #tpu.memory_space<vmem>>, vector<16x256xbf16>
    %c496 = arith.constant 496 : index
    %c0_78 = arith.constant 0 : index
    %73 = vector.load %arg11[%c496, %c0_78] : memref<576x256xbf16, #tpu.memory_space<vmem>>, vector<16x256xbf16>
    tpu.vector_store %arg11[%c496, %c0_78], %72 {strides = array<i32>} : memref<576x256xbf16, #tpu.memory_space<vmem>>, vector<16x256xbf16>,
    %c0_79 = arith.constant 0 : index
    %c104 = arith.constant 104 : index
    %74 = vector.load %arg10[%c0_79, %c104] : memref<16x512xbf16, #tpu.memory_space<vmem>>, vector<16x256xbf16>
    %c512 = arith.constant 512 : index
    %c0_80 = arith.constant 0 : index
    %75 = vector.load %arg11[%c512, %c0_80] : memref<576x256xbf16, #tpu.memory_space<vmem>>, vector<16x256xbf16>
    tpu.vector_store %arg11[%c512, %c0_80], %74 {strides = array<i32>} : memref<576x256xbf16, #tpu.memory_space<vmem>>, vector<16x256xbf16>,
    %c0_81 = arith.constant 0 : index
    %c192_82 = arith.constant 192 : index
    %76 = vector.load %arg10[%c0_81, %c192_82] : memref<16x512xbf16, #tpu.memory_space<vmem>>, vector<16x256xbf16>
    %c528 = arith.constant 528 : index
    %c0_83 = arith.constant 0 : index
    %77 = vector.load %arg11[%c528, %c0_83] : memref<576x256xbf16, #tpu.memory_space<vmem>>, vector<16x256xbf16>
    tpu.vector_store %arg11[%c528, %c0_83], %76 {strides = array<i32>} : memref<576x256xbf16, #tpu.memory_space<vmem>>, vector<16x256xbf16>,
    %c0_84 = arith.constant 0 : index
    %c196 = arith.constant 196 : index
    %78 = vector.load %arg10[%c0_84, %c196] : memref<16x512xbf16, #tpu.memory_space<vmem>>, vector<16x256xbf16>
    %c544 = arith.constant 544 : index
    %c0_85 = arith.constant 0 : index
    %79 = vector.load %arg11[%c544, %c0_85] : memref<576x256xbf16, #tpu.memory_space<vmem>>, vector<16x256xbf16>
    tpu.vector_store %arg11[%c544, %c0_85], %78 {strides = array<i32>} : memref<576x256xbf16, #tpu.memory_space<vmem>>, vector<16x256xbf16>,
    %c0_86 = arith.constant 0 : index
    %c200 = arith.constant 200 : index
    %80 = vector.load %arg10[%c0_86, %c200] : memref<16x512xbf16, #tpu.memory_space<vmem>>, vector<16x256xbf16>
    %c560 = arith.constant 560 : index
    %c0_87 = arith.constant 0 : index
    %81 = vector.load %arg11[%c560, %c0_87] : memref<576x256xbf16, #tpu.memory_space<vmem>>, vector<16x256xbf16>
    tpu.vector_store %arg11[%c560, %c0_87], %80 {strides = array<i32>} : memref<576x256xbf16, #tpu.memory_space<vmem>>, vector<16x256xbf16>,
    %c0_88 = arith.constant 0 : index
    %c0_89 = arith.constant 0 : index
    %82 = vector.load %arg3[%c0_88, %c0_89] : memref<32x576xbf16, #tpu.memory_space<vmem>>, vector<32x576xbf16>
    %c0_90 = arith.constant 0 : index
    %c0_91 = arith.constant 0 : index
    %83 = vector.load %arg11[%c0_90, %c0_91] : memref<576x256xbf16, #tpu.memory_space<vmem>>, vector<576x256xbf16>
    %cst = arith.constant dense<0.000000e+00> : vector<32x256xf32>
    %84 = tpu.matmul %82, %83, %cst {dimension_numbers = #tpu.dot_dimension_numbers<[1], [0], [0], [1], [0, 0, 1, 1], [], []>} : vector<32x576xbf16>, vector<576x256xbf16>, vector<32x256xf32> -> vector<32x256xf32>
    %c0_92 = arith.constant 0 : index
    %c0_93 = arith.constant 0 : index
    %85 = vector.load %arg4[%c0_92, %c0_93] : memref<32x1xf32, #tpu.memory_space<vmem>>, vector<32x1xf32>
    %86 = vector.broadcast %85 : vector<32x1xf32> to vector<32x256xf32>
    %87 = arith.mulf %84, %86 : vector<32x256xf32>
    %c0_94 = arith.constant 0 : index
    %c0_95 = arith.constant 0 : index
    %88 = vector.load %arg5[%c0_94, %c0_95] : memref<32x1xf32, #tpu.memory_space<vmem>>, vector<32x1xf32>
    %89 = vector.broadcast %88 : vector<32x1xf32> to vector<32x256xf32>
    %90 = arith.addf %87, %89 : vector<32x256xf32>
    %cst_96 = arith.constant 0.000000e+00 : f32
    %91 = vector.broadcast %cst_96 : f32 to vector<32x256xf32>
    %92 = arith.maximumf %90, %91 : vector<32x256xf32>
    %c0_97 = arith.constant 0 : index
    %c0_98 = arith.constant 0 : index
    %93 = vector.load %arg6[%c0_97, %c0_98] : memref<8x32xf32, #tpu.memory_space<vmem>>, vector<8x32xf32>
    %cst_99 = arith.constant dense<0.000000e+00> : vector<8x256xf32>
    %94 = tpu.matmul %93, %92, %cst_99 {dimension_numbers = #tpu.dot_dimension_numbers<[1], [0], [0], [1], [0, 0, 1, 1], [], []>} : vector<8x32xf32>, vector<32x256xf32>, vector<8x256xf32> -> vector<8x256xf32>
    %c0_100 = arith.constant 0 : index
    %c0_101 = arith.constant 0 : index
    %95 = vector.load %arg7[%c0_100, %c0_101] : memref<8x1xf32, #tpu.memory_space<vmem>>, vector<8x1xf32>
    %96 = vector.broadcast %95 : vector<8x1xf32> to vector<8x256xf32>
    %97 = arith.mulf %94, %96 : vector<8x256xf32>
    %c0_102 = arith.constant 0 : index
    %c0_103 = arith.constant 0 : index
    %98 = vector.load %arg8[%c0_102, %c0_103] : memref<8x1xf32, #tpu.memory_space<vmem>>, vector<8x1xf32>
    %99 = vector.broadcast %98 : vector<8x1xf32> to vector<8x256xf32>
    %100 = arith.addf %97, %99 : vector<8x256xf32>
    %cst_104 = arith.constant 0.000000e+00 : f32
    %101 = vector.broadcast %cst_104 : f32 to vector<8x256xf32>
    %102 = arith.maximumf %100, %101 : vector<8x256xf32>
    %103 = arith.truncf %102 : vector<8x256xf32> to vector<8x256xbf16>
    %c0_105 = arith.constant 0 : index
    %c0_106 = arith.constant 0 : index
    %c0_107 = arith.constant 0 : index
    %104 = vector.load %arg9[%c0_105, %c0_106, %c0_107] : memref<1x8x256xbf16, #tpu.memory_space<vmem>>, vector<1x8x256xbf16>
    %105 = vector.shape_cast %104 : vector<1x8x256xbf16> to vector<8x256xbf16>
    %106 = vector.shape_cast %103 : vector<8x256xbf16> to vector<1x8x256xbf16>
    tpu.vector_store %arg9[%c0_105, %c0_106, %c0_107], %106 {strides = array<i32>} : memref<1x8x256xbf16, #tpu.memory_space<vmem>>, vector<1x8x256xbf16>,
    return
  }
  func.func @transform_0(%arg0: i32, %arg1: i32) -> (i32, i32, i32, i32) {
    %c0_i32 = arith.constant 0 : i32
    %c0_i32_0 = arith.constant 0 : i32
    %c0_i32_1 = arith.constant 0 : i32
    %c0_i32_2 = arith.constant 0 : i32
    return %arg0, %c0_i32, %c0_i32_0, %c0_i32_1 : i32, i32, i32, i32
  }
  func.func @transform_1(%arg0: i32, %arg1: i32) -> (i32, i32) {
    %c0_i32 = arith.constant 0 : i32
    %c0_i32_0 = arith.constant 0 : i32
    %c0_i32_1 = arith.constant 0 : i32
    return %c0_i32, %c0_i32_0 : i32, i32
  }
  func.func @transform_2(%arg0: i32, %arg1: i32) -> (i32, i32) {
    %c0_i32 = arith.constant 0 : i32
    %c0_i32_0 = arith.constant 0 : i32
    %c0_i32_1 = arith.constant 0 : i32
    return %c0_i32, %c0_i32_0 : i32, i32
  }
  func.func @transform_3(%arg0: i32, %arg1: i32) -> (i32, i32) {
    %c0_i32 = arith.constant 0 : i32
    %c0_i32_0 = arith.constant 0 : i32
    %c0_i32_1 = arith.constant 0 : i32
    return %c0_i32, %c0_i32_0 : i32, i32
  }
  func.func @transform_4(%arg0: i32, %arg1: i32) -> (i32, i32) {
    %c0_i32 = arith.constant 0 : i32
    %c0_i32_0 = arith.constant 0 : i32
    %c0_i32_1 = arith.constant 0 : i32
    return %c0_i32, %c0_i32_0 : i32, i32
  }
  func.func @transform_5(%arg0: i32, %arg1: i32) -> (i32, i32) {
    %c0_i32 = arith.constant 0 : i32
    %c0_i32_0 = arith.constant 0 : i32
    %c0_i32_1 = arith.constant 0 : i32
    return %c0_i32, %c0_i32_0 : i32, i32
  }
  func.func @transform_6(%arg0: i32, %arg1: i32) -> (i32, i32) {
    %c0_i32 = arith.constant 0 : i32
    %c0_i32_0 = arith.constant 0 : i32
    %c0_i32_1 = arith.constant 0 : i32
    return %c0_i32, %c0_i32_0 : i32, i32
  }
  func.func @transform_7(%arg0: i32, %arg1: i32) -> (i32, i32, i32) {
    %c0_i32 = arith.constant 0 : i32
    %c0_i32_0 = arith.constant 0 : i32
    return %arg0, %c0_i32, %arg1 : i32, i32, i32
  }
}

</mosaic_0001>

<llo_original>
// kernel: encode_asp_forward.1
$region0: #{encode_asp_forward.1}
  #allocation0 [shape = 'u32[]', space=smem, size = 0x4, offset = 0x4, fixed_abs, tag = 'smem constant byte address 0x4 - core index']
  #allocation1 [shape = 'u32[72,128]{1,0:T(1,128)}', space=vmem, size = 0x9000, scoped, tag = 'internal scratch']
  #allocation2 [shape = 'bf16[16,512]{1,0:T(8,128)(2,1)}', space=vmem, size = 0x4000, scoped, tag = 'scratch operand']
  #allocation3 [shape = 'bf16[576,256]{1,0:T(8,128)(2,1)}', space=vmem, size = 0x48000, scoped, tag = 'scratch operand']
  %s0 = inlined_call_operand.vmem [shape: bf16[2,4,16,256], index: 0, kind: input, shape index: {}]
  %s1 = inlined_call_operand.vmem [shape: bf16[32,576], index: 1, kind: input, shape index: {}]
  %s2 = inlined_call_operand.vmem [shape: f32[32,1], index: 2, kind: input, shape index: {}]
  %s3 = inlined_call_operand.vmem [shape: f32[32,1], index: 3, kind: input, shape index: {}]
  %s4 = inlined_call_operand.vmem [shape: f32[8,32], index: 4, kind: input, shape index: {}]
  %s5 = inlined_call_operand.vmem [shape: f32[8,1], index: 5, kind: input, shape index: {}]
  %s6 = inlined_call_operand.vmem [shape: f32[8,1], index: 6, kind: input, shape index: {}]
  %s7 = inlined_call_operand.vmem [shape: bf16[2,8,768], index: 7, kind: output, shape index: {}]
  %s8 = sld [smem:[#allocation0]]
  $region61: #{encode_asp_forward.1} parent=0
    _
  %s10 = ssub.s32 1, %s8
  %s11 = scalar_select 0, %s10, %s8
  loop: start=0, step=1, limit=8
  $region2: #{encode_asp_forward.1} parent=0 // loop_pre_header
    _
  $region3: #{encode_asp_forward.1} parent=0 // loop_header
    %s13 = sphi 0, %s17
    %p14 = scmp.ge.s32.totalorder %s13, 8
    %s20 = sphi 0, %s32
    %s21 = sphi 0, %s28
    %s22 = sphi 0, %s20
    %s23 = sphi 0, %s21
    %s24 = sphi 0, %s22
    %s25 = sphi 0, %s23
    %s35 = sphi 0, %s37
    %s38 = sphi 0, %s35
    %s39 = sphi 0, %s38
    %s55 = sphi 0, %s39
    %s59 = sphi 0, %s59
    %s61 = sphi 0, %s59
    %s62 = sphi 0, %s61
    %s76 = sphi 0, %s62
    %s80 = sphi 0, %s80
    %s82 = sphi 0, %s80
    %s83 = sphi 0, %s82
    %s97 = sphi 0, %s83
    %s101 = sphi 0, %s101
    %s103 = sphi 0, %s101
    %s104 = sphi 0, %s103
    %s118 = sphi 0, %s104
    %s122 = sphi 0, %s122
    %s124 = sphi 0, %s122
    %s125 = sphi 0, %s124
    %s139 = sphi 0, %s125
    %s143 = sphi 0, %s143
    %s145 = sphi 0, %s143
    %s146 = sphi 0, %s145
    %s160 = sphi 0, %s146
    %s164 = sphi 0, %s164
    %s166 = sphi 0, %s164
    %s167 = sphi 0, %s166
    %s181 = sphi 0, %s167
    %s189 = sphi 0, %s191
    %s192 = sphi 0, %s189
    %s193 = sphi 0, %s192
    %s209 = sphi 0, %s193
  $region4: #{encode_asp_forward.1} parent=0 // loop_header_branch
    %16 = sbr.rel (%p14) target = $region8
  $region5: #{encode_asp_forward.1} parent=0 // loop_body
    %s18 = ssub.s32 %s13, 1
    %s19 = ssub.s32 %s13, 2
    %s26 = sadd.s32 1, %s21
    %p27 = scmp.ge.s32.totalorder %s26, 3
    %s28 = scalar_select %p27, 0, %s26
    %s29 = sadd.s32 1, %s20
    %s30 = scalar_select %p27, %s29, %s20
    %p31 = scmp.ge.s32.totalorder %s30, 2
    %s32 = scalar_select %p31, 0, %s30
    %s33 = ssub.s32 %s20, %s32
    %p34 = scmp.eq.s32.totalorder %s33, 0
    %s36 = sadd.s32 %s35, 1
    %s37 = scalar_select %p34, %s35, %s36
    %p40 = pneg %p34
    %p41 = scmp.eq.s32.totalorder %s13, 5
    %p42 = por %p40, %p41
    %p43 = scmp.ne.s32.totalorder %s35, %s38
    %p44 = scmp.eq.s32.totalorder %s13, 0
    %p45 = por %p43, %p44
    %p46 = scmp.ne.s32.totalorder %s35, %s38
    %p47 = scmp.eq.s32.totalorder %s18, 5
    %p48 = por %p46, %p47
    %p49 = scmp.ne.s32.totalorder %s38, %s39
    %p50 = scmp.eq.s32.totalorder %s18, 0
    %p51 = por %p49, %p50
    %p52 = scmp.ne.s32.totalorder %s38, %s39
    %p53 = scmp.eq.s32.totalorder %s19, 5
    %p54 = por %p52, %p53
    %p56 = scmp.ne.s32.totalorder %s39, %s55
    %p57 = scmp.eq.s32.totalorder %s19, 0
    %p58 = por %p56, %p57
    %s60 = sadd.s32 %s59, 1
    %p63 = scmp.eq.s32.totalorder %s13, 5
    %p64 = scmp.ne.s32.totalorder %s59, %s61
    %p65 = scmp.eq.s32.totalorder %s13, 0
    %p66 = por %p64, %p65
    %p67 = scmp.ne.s32.totalorder %s59, %s61
    %p68 = scmp.eq.s32.totalorder %s18, 5
    %p69 = por %p67, %p68
    %p70 = scmp.ne.s32.totalorder %s61, %s62
    %p71 = scmp.eq.s32.totalorder %s18, 0
    %p72 = por %p70, %p71
    %p73 = scmp.ne.s32.totalorder %s61, %s62
    %p74 = scmp.eq.s32.totalorder %s19, 5
    %p75 = por %p73, %p74
    %p77 = scmp.ne.s32.totalorder %s62, %s76
    %p78 = scmp.eq.s32.totalorder %s19, 0
    %p79 = por %p77, %p78
    %s81 = sadd.s32 %s80, 1
    %p84 = scmp.eq.s32.totalorder %s13, 5
    %p85 = scmp.ne.s32.totalorder %s80, %s82
    %p86 = scmp.eq.s32.totalorder %s13, 0
    %p87 = por %p85, %p86
    %p88 = scmp.ne.s32.totalorder %s80, %s82
    %p89 = scmp.eq.s32.totalorder %s18, 5
    %p90 = por %p88, %p89
    %p91 = scmp.ne.s32.totalorder %s82, %s83
    %p92 = scmp.eq.s32.totalorder %s18, 0
    %p93 = por %p91, %p92
    %p94 = scmp.ne.s32.totalorder %s82, %s83
    %p95 = scmp.eq.s32.totalorder %s19, 5
    %p96 = por %p94, %p95
    %p98 = scmp.ne.s32.totalorder %s83, %s97
    %p99 = scmp.eq.s32.totalorder %s19, 0
    %p100 = por %p98, %p99
    %s102 = sadd.s32 %s101, 1
    %p105 = scmp.eq.s32.totalorder %s13, 5
    %p106 = scmp.ne.s32.totalorder %s101, %s103
    %p107 = scmp.eq.s32.totalorder %s13, 0
    %p108 = por %p106, %p107
    %p109 = scmp.ne.s32.totalorder %s101, %s103
    %p110 = scmp.eq.s32.totalorder %s18, 5
    %p111 = por %p109, %p110
    %p112 = scmp.ne.s32.totalorder %s103, %s104
    %p113 = scmp.eq.s32.totalorder %s18, 0
    %p114 = por %p112, %p113
    %p115 = scmp.ne.s32.totalorder %s103, %s104
    %p116 = scmp.eq.s32.totalorder %s19, 5
    %p117 = por %p115, %p116
    %p119 = scmp.ne.s32.totalorder %s104, %s118
    %p120 = scmp.eq.s32.totalorder %s19, 0
    %p121 = por %p119, %p120
    %s123 = sadd.s32 %s122, 1
    %p126 = scmp.eq.s32.totalorder %s13, 5
    %p127 = scmp.ne.s32.totalorder %s122, %s124
    %p128 = scmp.eq.s32.totalorder %s13, 0
    %p129 = por %p127, %p128
    %p130 = scmp.ne.s32.totalorder %s122, %s124
    %p131 = scmp.eq.s32.totalorder %s18, 5
    %p132 = por %p130, %p131
    %p133 = scmp.ne.s32.totalorder %s124, %s125
    %p134 = scmp.eq.s32.totalorder %s18, 0
    %p135 = por %p133, %p134
    %p136 = scmp.ne.s32.totalorder %s124, %s125
    %p137 = scmp.eq.s32.totalorder %s19, 5
    %p138 = por %p136, %p137
    %p140 = scmp.ne.s32.totalorder %s125, %s139
    %p141 = scmp.eq.s32.totalorder %s19, 0
    %p142 = por %p140, %p141
    %s144 = sadd.s32 %s143, 1
    %p147 = scmp.eq.s32.totalorder %s13, 5
    %p148 = scmp.ne.s32.totalorder %s143, %s145
    %p149 = scmp.eq.s32.totalorder %s13, 0
    %p150 = por %p148, %p149
    %p151 = scmp.ne.s32.totalorder %s143, %s145
    %p152 = scmp.eq.s32.totalorder %s18, 5
    %p153 = por %p151, %p152
    %p154 = scmp.ne.s32.totalorder %s145, %s146
    %p155 = scmp.eq.s32.totalorder %s18, 0
    %p156 = por %p154, %p155
    %p157 = scmp.ne.s32.totalorder %s145, %s146
    %p158 = scmp.eq.s32.totalorder %s19, 5
    %p159 = por %p157, %p158
    %p161 = scmp.ne.s32.totalorder %s146, %s160
    %p162 = scmp.eq.s32.totalorder %s19, 0
    %p163 = por %p161, %p162
    %s165 = sadd.s32 %s164, 1
    %p168 = scmp.eq.s32.totalorder %s13, 5
    %p169 = scmp.ne.s32.totalorder %s164, %s166
    %p170 = scmp.eq.s32.totalorder %s13, 0
    %p171 = por %p169, %p170
    %p172 = scmp.ne.s32.totalorder %s164, %s166
    %p173 = scmp.eq.s32.totalorder %s18, 5
    %p174 = por %p172, %p173
    %p175 = scmp.ne.s32.totalorder %s166, %s167
    %p176 = scmp.eq.s32.totalorder %s18, 0
    %p177 = por %p175, %p176
    %p178 = scmp.ne.s32.totalorder %s166, %s167
    %p179 = scmp.eq.s32.totalorder %s19, 5
    %p180 = por %p178, %p179
    %p182 = scmp.ne.s32.totalorder %s167, %s181
    %p183 = scmp.eq.s32.totalorder %s19, 0
    %p184 = por %p182, %p183
    %s185 = ssub.s32 %s20, %s32
    %s186 = ssub.s32 %s21, %s28
    %s187 = sor.u32 %s185, %s186
    %p188 = scmp.eq.s32.totalorder %s187, 0
    %s190 = sadd.s32 %s189, 1
    %s191 = scalar_select %p188, %s189, %s190
    %p194 = pneg %p188
    %p195 = scmp.eq.s32.totalorder %s13, 5
    %p196 = por %p194, %p195
    %p197 = scmp.ne.s32.totalorder %s189, %s192
    %p198 = scmp.eq.s32.totalorder %s13, 0
    %p199 = por %p197, %p198
    %p200 = scmp.ne.s32.totalorder %s189, %s192
    %p201 = scmp.eq.s32.totalorder %s18, 5
    %p202 = por %p200, %p201
    %p203 = scmp.ne.s32.totalorder %s192, %s193
    %p204 = scmp.eq.s32.totalorder %s18, 0
    %p205 = por %p203, %p204
    %p206 = scmp.ne.s32.totalorder %s192, %s193
    %p207 = scmp.eq.s32.totalorder %s19, 5
    %p208 = por %p206, %p207
    %p210 = scmp.ne.s32.totalorder %s193, %s209
    %p211 = scmp.eq.s32.totalorder %s19, 0
    %p212 = por %p210, %p211
    %p213 = scmp.le.s32.totalorder 1, %s13
    %p214 = scmp.lt.s32.totalorder %s13, 7
    %p215 = pnand %p213, %p214
    %p216 = pneg %p215
    // Predicated region
    $region9: #{encode_asp_forward.1} parent=5 // pred_check
      _
    $region10: #{encode_asp_forward.1} parent=5 // pred_check_branch
      %218 = sbr.rel (%p215) target = $region12
    $region11: #{encode_asp_forward.1} parent=5 // pred_region
      %s219 = ssub.s32 %s13, 1
      // Predicated region
      $region13: #{encode_asp_forward.1} parent=11 // pred_check
        %p220 = pneg %p72
      $region14: #{encode_asp_forward.1} parent=11 // pred_check_branch
        %222 = sbr.rel (%p220) target = $region16
      $region15: #{encode_asp_forward.1} parent=11 // pred_region
        _
      $region16: #{encode_asp_forward.1} parent=11 // pred_fallthru
        _
      // Predicated region
      $region17: #{encode_asp_forward.1} parent=11 // pred_check
        %p223 = pneg %p93
      $region18: #{encode_asp_forward.1} parent=11 // pred_check_branch
        %225 = sbr.rel (%p223) target = $region20
      $region19: #{encode_asp_forward.1} parent=11 // pred_region
        _
      $region20: #{encode_asp_forward.1} parent=11 // pred_fallthru
        _
      // Predicated region
      $region21: #{encode_asp_forward.1} parent=11 // pred_check
        %p226 = pneg %p114
      $region22: #{encode_asp_forward.1} parent=11 // pred_check_branch
        %228 = sbr.rel (%p226) target = $region24
      $region23: #{encode_asp_forward.1} parent=11 // pred_region
        _
      $region24: #{encode_asp_forward.1} parent=11 // pred_fallthru
        _
      // Predicated region
      $region25: #{encode_asp_forward.1} parent=11 // pred_check
        %p229 = pneg %p135
      $region26: #{encode_asp_forward.1} parent=11 // pred_check_branch
        %231 = sbr.rel (%p229) target = $region28
      $region27: #{encode_asp_forward.1} parent=11 // pred_region
        _
      $region28: #{encode_asp_forward.1} parent=11 // pred_fallthru
        _
      // Predicated region
      $region29: #{encode_asp_forward.1} parent=11 // pred_check
        %p232 = pneg %p156
      $region30: #{encode_asp_forward.1} parent=11 // pred_check_branch
        %234 = sbr.rel (%p232) target = $region32
      $region31: #{encode_asp_forward.1} parent=11 // pred_region
        _
      $region32: #{encode_asp_forward.1} parent=11 // pred_fallthru
        _
      // Predicated region
      $region33: #{encode_asp_forward.1} parent=11 // pred_check
        %p235 = pneg %p177
      $region34: #{encode_asp_forward.1} parent=11 // pred_check_branch
        %237 = sbr.rel (%p235) target = $region36
      $region35: #{encode_asp_forward.1} parent=11 // pred_region
        _
      $region36: #{encode_asp_forward.1} parent=11 // pred_fallthru
        _
    $region12: #{encode_asp_forward.1} parent=5 // pred_fallthru
      _
    %p238 = scmp.lt.s32.totalorder %s13, 6
    // Predicated region
    $region37: #{encode_asp_forward.1} parent=5 // pred_check
      %p239 = pneg %p238
    $region38: #{encode_asp_forward.1} parent=5 // pred_check_branch
      %241 = sbr.rel (%p239) target = $region40
    $region39: #{encode_asp_forward.1} parent=5 // pred_region
      // Predicated region
      $region41: #{encode_asp_forward.1} parent=39 // pred_check
        %p242 = pneg %p45
      $region42: #{encode_asp_forward.1} parent=39 // pred_check_branch
        %244 = sbr.rel (%p242) target = $region44
      $region43: #{encode_asp_forward.1} parent=39 // pred_region
        %p245 = scmp.lt.s32.totalorder %s20, 1
        %s246 = scalar_select %p245, %s20, 1
        %s247 = smul.addr %s246, 16
        %s248 = smul.addr %s247, 4
        %s249 = scalar_lea.vmem %s0, %s248
      $region44: #{encode_asp_forward.1} parent=39 // pred_fallthru
        _
    $region40: #{encode_asp_forward.1} parent=5 // pred_fallthru
      _
    %p250 = scmp.le.s32.totalorder 1, %s13
    %p251 = scmp.lt.s32.totalorder %s13, 7
    %p252 = pnand %p250, %p251
    %p253 = pneg %p252
    // Predicated region
    $region45: #{encode_asp_forward.1} parent=5 // pred_check
      _
    $region46: #{encode_asp_forward.1} parent=5 // pred_check_branch
      %255 = sbr.rel (%p252) target = $region48
    $region47: #{encode_asp_forward.1} parent=5 // pred_region
      %s256 = ssub.s32 %s13, 1
      %p257 = scmp.lt.s32.totalorder %s22, 1
      %s258 = scalar_select %p257, %s22, 1
      %s259 = smul.addr %s258, 16
      %s260 = smul.addr %s259, 4
      %s261 = scalar_lea.vmem %s0, %s260
      %p262 = pneg %p51
      %p263 = pneg %p48
      %p264 = pneg %p72
      %p265 = pneg %p69
      %p266 = pneg %p93
      %p267 = pneg %p90
      %p268 = pneg %p114
      %p269 = pneg %p111
      %p270 = pneg %p135
      %p271 = pneg %p132
      %p272 = pneg %p156
      %p273 = pneg %p153
      %p274 = pneg %p177
      %p275 = pneg %p174
      %p276 = pneg %p205
      %p277 = pneg %p202
      %s278 = smul.u32 2, %s23
      %p279 = scmp.lt.s32.totalorder %s22, 1
      %s280 = scalar_select %p279, %s22, 1
      %p281 = scmp.lt.s32.totalorder %s278, 5
      %s282 = scalar_select %p281, %s278, 5
      %s283 = smul.addr %s280, 6
      %s284 = sadd.s32 %s282, %s283
      %s285 = smul.addr %s284, 4
      %s286 = scalar_lea.vmem %s7, %s285
      %p287 = scmp.lt.s32.totalorder %s22, 1
      %s288 = scalar_select %p287, %s22, 1
      %s289 = smul.addr %s288, 16
      %s290 = smul.addr %s289, 4
      %s291 = scalar_lea.vmem %s0, %s290
      %s292 = smul.u32 2, %s23
      %p293 = scmp.lt.s32.totalorder %s22, 1
      %s294 = scalar_select %p293, %s22, 1
      %p295 = scmp.lt.s32.totalorder %s292, 5
      %s296 = scalar_select %p295, %s292, 5
      %s297 = smul.addr %s294, 6
      %s298 = sadd.s32 %s296, %s297
      %s299 = smul.addr %s298, 4
      %s300 = scalar_lea.vmem %s7, %s299
      %s301 = smul.u32 2, %s23
      %s303 = smul.u32 %s23, 4
      %s304 = smul.addr %s303, 4
      %s305 = scalar_lea.vmem %s291, %s304
      %v306 = vld [vmem:[%s305] sm:$0xff]
      %v307 = vld [vmem:[%s305 + $0x8] sm:$0xff]
      %308 = vst [vmem:[#allocation2] sm:$0xff] %v306
      %309 = vst [vmem:[#allocation2 + $0x10] sm:$0xff] %v307
      %s310 = sadd.s32 %s23, 1
      %s311 = smul.u32 %s310, 4
      %s312 = smul.addr %s311, 4
      %s313 = scalar_lea.vmem %s291, %s312
      %v314 = vld [vmem:[%s313] sm:$0xff]
      %v315 = vld [vmem:[%s313 + $0x8] sm:$0xff]
      %316 = vst [vmem:[#allocation2 + $0x8] sm:$0xff] %v314
      %317 = vst [vmem:[#allocation2 + $0x18] sm:$0xff] %v315
      %v318 = vld [vmem:[#allocation2] sm:$0xff]
      %v319 = vld [vmem:[#allocation2 + $0x8] sm:$0xf]
      %v320 = vld [vmem:[#allocation2 + $0x10] sm:$0xff]
      %v321 = vld [vmem:[#allocation2 + $0x18] sm:$0xf]
      %326 = vrot.lane.b32.xlu0 %v318, 53
      %v327 = vpop.permute.xlu0 %326
      %328 = vrot.lane.b32.xlu0 %v319, 53
      %v329 = vpop.permute.xlu0 %328
      %330 = vrot.lane.b32.xlu0 %v320, 53
      %v331 = vpop.permute.xlu0 %330
      %332 = vrot.lane.b32.xlu0 %v321, 53
      %v333 = vpop.permute.xlu0 %332
      %v334 = vrot.slane %v327, 4
      %v335 = vrot.slane %v329, 4
      %v336 = vrot.slane %v331, 4
      %v337 = vrot.slane %v333, 4
      %vm338 = vcmask 1043456
      %v339 = vsel %vm338, %v334, %v335
      %vm340 = vcmask 433152
      %v341 = vsel %vm340, %v327, %v339
      %v342 = vsel %vm338, %v336, %v337
      %v343 = vsel %vm340, %v331, %v342
      %346 = vst [vmem:[#allocation3] sm:$0xff] %v341
      %347 = vst [vmem:[#allocation3 + $0x8] sm:$0xff] %v343
      %v348 = vld [vmem:[#allocation2] sm:$0xff]
      %v349 = vld [vmem:[#allocation2 + $0x8] sm:$0xf]
      %v350 = vld [vmem:[#allocation2 + $0x10] sm:$0xff]
      %v351 = vld [vmem:[#allocation2 + $0x18] sm:$0xf]
      %356 = vrot.lane.b32.xlu0 %v348, 52
      %v357 = vpop.permute.xlu0 %356
      %358 = vrot.lane.b32.xlu0 %v349, 52
      %v359 = vpop.permute.xlu0 %358
      %360 = vrot.lane.b32.xlu0 %v350, 52
      %v361 = vpop.permute.xlu0 %360
      %362 = vrot.lane.b32.xlu0 %v351, 52
      %v363 = vpop.permute.xlu0 %362
      %v364 = vrot.slane %v357, 4
      %v365 = vrot.slane %v359, 4
      %v366 = vrot.slane %v361, 4
      %v367 = vrot.slane %v363, 4
      %v368 = vsel %vm338, %v364, %v365
      %vm369 = vcmask 424960
      %v370 = vsel %vm369, %v357, %v368
      %v371 = vsel %vm338, %v366, %v367
      %v372 = vsel %vm369, %v361, %v371
      %375 = vst [vmem:[#allocation3 + $0x10] sm:$0xff] %v370
      %376 = vst [vmem:[#allocation3 + $0x18] sm:$0xff] %v372
      %v377 = vld [vmem:[#allocation2] sm:$0xff]
      %v378 = vld [vmem:[#allocation2 + $0x8] sm:$0xf]
      %v379 = vld [vmem:[#allocation2 + $0x10] sm:$0xff]
      %v380 = vld [vmem:[#allocation2 + $0x18] sm:$0xf]
      %385 = vrot.lane.b32.xlu0 %v377, 51
      %v386 = vpop.permute.xlu0 %385
      %387 = vrot.lane.b32.xlu0 %v378, 51
      %v388 = vpop.permute.xlu0 %387
      %389 = vrot.lane.b32.xlu0 %v379, 51
      %v390 = vpop.permute.xlu0 %389
      %391 = vrot.lane.b32.xlu0 %v380, 51
      %v392 = vpop.permute.xlu0 %391
      %v393 = vrot.slane %v386, 4
      %v394 = vrot.slane %v388, 4
      %v395 = vrot.slane %v390, 4
      %v396 = vrot.slane %v392, 4
      %v397 = vsel %vm338, %v393, %v394
      %vm398 = vcmask 416768
      %v399 = vsel %vm398, %v386, %v397
      %v400 = vsel %vm338, %v395, %v396
      %v401 = vsel %vm398, %v390, %v400
      %404 = vst [vmem:[#allocation3 + $0x20] sm:$0xff] %v399
      %405 = vst [vmem:[#allocation3 + $0x28] sm:$0xff] %v401
      %v406 = vld [vmem:[#allocation2] sm:$0xff]
      %v407 = vld [vmem:[#allocation2 + $0x8] sm:$0xf]
      %v408 = vld [vmem:[#allocation2 + $0x10] sm:$0xff]
      %v409 = vld [vmem:[#allocation2 + $0x18] sm:$0xf]
      %414 = vrot.lane.b32.xlu0 %v406, 29
      %v415 = vpop.permute.xlu0 %414
      %416 = vrot.lane.b32.xlu0 %v407, 29
      %v417 = vpop.permute.xlu0 %416
      %418 = vrot.lane.b32.xlu0 %v408, 29
      %v419 = vpop.permute.xlu0 %418
      %420 = vrot.lane.b32.xlu0 %v409, 29
      %v421 = vpop.permute.xlu0 %420
      %v422 = vrot.slane %v415, 4
      %v423 = vrot.slane %v417, 4
      %v424 = vrot.slane %v419, 4
      %v425 = vrot.slane %v421, 4
      %v426 = vsel %vm338, %v422, %v423
      %vm427 = vcmask 236544
      %v428 = vsel %vm427, %v415, %v426
      %v429 = vsel %vm338, %v424, %v425
      %v430 = vsel %vm427, %v419, %v429
      %433 = vst [vmem:[#allocation3 + $0x30] sm:$0xff] %v428
      %434 = vst [vmem:[#allocation3 + $0x38] sm:$0xff] %v430
      %v435 = vld [vmem:[#allocation2] sm:$0xff]
      %v436 = vld [vmem:[#allocation2 + $0x8] sm:$0xf]
      %v437 = vld [vmem:[#allocation2 + $0x10] sm:$0xff]
      %v438 = vld [vmem:[#allocation2 + $0x18] sm:$0xf]
      %443 = vrot.lane.b32.xlu0 %v435, 28
      %v444 = vpop.permute.xlu0 %443
      %445 = vrot.lane.b32.xlu0 %v436, 28
      %v446 = vpop.permute.xlu0 %445
      %447 = vrot.lane.b32.xlu0 %v437, 28
      %v448 = vpop.permute.xlu0 %447
      %449 = vrot.lane.b32.xlu0 %v438, 28
      %v450 = vpop.permute.xlu0 %449
      %v451 = vrot.slane %v444, 4
      %v452 = vrot.slane %v446, 4
      %v453 = vrot.slane %v448, 4
      %v454 = vrot.slane %v450, 4
      %v455 = vsel %vm338, %v451, %v452
      %vm456 = vcmask 228352
      %v457 = vsel %vm456, %v444, %v455
      %v458 = vsel %vm338, %v453, %v454
      %v459 = vsel %vm456, %v448, %v458
      %462 = vst [vmem:[#allocation3 + $0x40] sm:$0xff] %v457
      %463 = vst [vmem:[#allocation3 + $0x48] sm:$0xff] %v459
      %v464 = vld [vmem:[#allocation2] sm:$0xff]
      %v465 = vld [vmem:[#allocation2 + $0x8] sm:$0xf]
      %v466 = vld [vmem:[#allocation2 + $0x10] sm:$0xff]
      %v467 = vld [vmem:[#allocation2 + $0x18] sm:$0xf]
      %472 = vrot.lane.b32.xlu0 %v464, 27
      %v473 = vpop.permute.xlu0 %472
      %474 = vrot.lane.b32.xlu0 %v465, 27
      %v475 = vpop.permute.xlu0 %474
      %476 = vrot.lane.b32.xlu0 %v466, 27
      %v477 = vpop.permute.xlu0 %476
      %478 = vrot.lane.b32.xlu0 %v467, 27
      %v479 = vpop.permute.xlu0 %478
      %v480 = vrot.slane %v473, 4
      %v481 = vrot.slane %v475, 4
      %v482 = vrot.slane %v477, 4
      %v483 = vrot.slane %v479, 4
      %v484 = vsel %vm338, %v480, %v481
      %vm485 = vcmask 220160
      %v486 = vsel %vm485, %v473, %v484
      %v487 = vsel %vm338, %v482, %v483
      %v488 = vsel %vm485, %v477, %v487
      %491 = vst [vmem:[#allocation3 + $0x50] sm:$0xff] %v486
      %492 = vst [vmem:[#allocation3 + $0x58] sm:$0xff] %v488
      %v493 = vld [vmem:[#allocation2] sm:$0xff]
      %v494 = vld [vmem:[#allocation2 + $0x8] sm:$0xf]
      %v495 = vld [vmem:[#allocation2 + $0x10] sm:$0xff]
      %v496 = vld [vmem:[#allocation2 + $0x18] sm:$0xf]
      %501 = vrot.lane.b32.xlu0 %v493, 5
      %v502 = vpop.permute.xlu0 %501
      %503 = vrot.lane.b32.xlu0 %v494, 5
      %v504 = vpop.permute.xlu0 %503
      %505 = vrot.lane.b32.xlu0 %v495, 5
      %v506 = vpop.permute.xlu0 %505
      %507 = vrot.lane.b32.xlu0 %v496, 5
      %v508 = vpop.permute.xlu0 %507
      %v509 = vrot.slane %v502, 4
      %v510 = vrot.slane %v504, 4
      %v511 = vrot.slane %v506, 4
      %v512 = vrot.slane %v508, 4
      %v513 = vsel %vm338, %v509, %v510
      %vm514 = vcmask 39936
      %v515 = vsel %vm514, %v502, %v513
      %v516 = vsel %vm338, %v511, %v512
      %v517 = vsel %vm514, %v506, %v516
      %520 = vst [vmem:[#allocation3 + $0x60] sm:$0xff] %v515
      %521 = vst [vmem:[#allocation3 + $0x68] sm:$0xff] %v517
      %v522 = vld [vmem:[#allocation2] sm:$0xff]
      %v523 = vld [vmem:[#allocation2 + $0x8] sm:$0xf]
      %v524 = vld [vmem:[#allocation2 + $0x10] sm:$0xff]
      %v525 = vld [vmem:[#allocation2 + $0x18] sm:$0xf]
      %530 = vrot.lane.b32.xlu0 %v522, 4
      %v531 = vpop.permute.xlu0 %530
      %532 = vrot.lane.b32.xlu0 %v523, 4
      %v533 = vpop.permute.xlu0 %532
      %534 = vrot.lane.b32.xlu0 %v524, 4
      %v535 = vpop.permute.xlu0 %534
      %536 = vrot.lane.b32.xlu0 %v525, 4
      %v537 = vpop.permute.xlu0 %536
      %v538 = vrot.slane %v531, 4
      %v539 = vrot.slane %v533, 4
      %v540 = vrot.slane %v535, 4
      %v541 = vrot.slane %v537, 4
      %v542 = vsel %vm338, %v538, %v539
      %vm543 = vcmask 31744
      %v544 = vsel %vm543, %v531, %v542
      %v545 = vsel %vm338, %v540, %v541
      %v546 = vsel %vm543, %v535, %v545
      %549 = vst [vmem:[#allocation3 + $0x70] sm:$0xff] %v544
      %550 = vst [vmem:[#allocation3 + $0x78] sm:$0xff] %v546
      %v551 = vld [vmem:[#allocation2] sm:$0xff]
      %v552 = vld [vmem:[#allocation2 + $0x8] sm:$0xf]
      %v553 = vld [vmem:[#allocation2 + $0x10] sm:$0xff]
      %v554 = vld [vmem:[#allocation2 + $0x18] sm:$0xf]
      %559 = vrot.lane.b32.xlu0 %v551, 3
      %v560 = vpop.permute.xlu0 %559
      %561 = vrot.lane.b32.xlu0 %v552, 3
      %v562 = vpop.permute.xlu0 %561
      %563 = vrot.lane.b32.xlu0 %v553, 3
      %v564 = vpop.permute.xlu0 %563
      %565 = vrot.lane.b32.xlu0 %v554, 3
      %v566 = vpop.permute.xlu0 %565
      %v567 = vrot.slane %v560, 4
      %v568 = vrot.slane %v562, 4
      %v569 = vrot.slane %v564, 4
      %v570 = vrot.slane %v566, 4
      %v571 = vsel %vm338, %v567, %v568
      %vm572 = vcmask 23552
      %v573 = vsel %vm572, %v560, %v571
      %v574 = vsel %vm338, %v569, %v570
      %v575 = vsel %vm572, %v564, %v574
      %578 = vst [vmem:[#allocation3 + $0x80] sm:$0xff] %v573
      %579 = vst [vmem:[#allocation3 + $0x88] sm:$0xff] %v575
      %v580 = vld [vmem:[#allocation2] sm:$0xff]
      %v581 = vld [vmem:[#allocation2 + $0x8] sm:$0xf]
      %v582 = vld [vmem:[#allocation2 + $0x10] sm:$0xff]
      %v583 = vld [vmem:[#allocation2 + $0x18] sm:$0xf]
      %588 = vrot.lane.b32.xlu0 %v580, 78
      %v589 = vpop.permute.xlu0 %588
      %590 = vrot.lane.b32.xlu0 %v581, 78
      %v591 = vpop.permute.xlu0 %590
      %592 = vrot.lane.b32.xlu0 %v582, 78
      %v593 = vpop.permute.xlu0 %592
      %594 = vrot.lane.b32.xlu0 %v583, 78
      %v595 = vpop.permute.xlu0 %594
      %v596 = vrot.slane %v589, 4
      %v597 = vrot.slane %v591, 4
      %v598 = vrot.slane %v593, 4
      %v599 = vrot.slane %v595, 4
      %v600 = vsel %vm338, %v596, %v597
      %vm601 = vcmask 637952
      %v602 = vsel %vm601, %v589, %v600
      %v603 = vsel %vm338, %v598, %v599
      %v604 = vsel %vm601, %v593, %v603
      %607 = vst [vmem:[#allocation3 + $0x90] sm:$0xff] %v602
      %608 = vst [vmem:[#allocation3 + $0x98] sm:$0xff] %v604
      %v609 = vld [vmem:[#allocation2] sm:$0xff]
      %v610 = vld [vmem:[#allocation2 + $0x8] sm:$0xf]
      %v611 = vld [vmem:[#allocation2 + $0x10] sm:$0xff]
      %v612 = vld [vmem:[#allocation2 + $0x18] sm:$0xf]
      %617 = vrot.lane.b32.xlu0 %v609, 76
      %v618 = vpop.permute.xlu0 %617
      %619 = vrot.lane.b32.xlu0 %v610, 76
      %v620 = vpop.permute.xlu0 %619
      %621 = vrot.lane.b32.xlu0 %v611, 76
      %v622 = vpop.permute.xlu0 %621
      %623 = vrot.lane.b32.xlu0 %v612, 76
      %v624 = vpop.permute.xlu0 %623
      %v625 = vrot.slane %v618, 4
      %v626 = vrot.slane %v620, 4
      %v627 = vrot.slane %v622, 4
      %v628 = vrot.slane %v624, 4
      %v629 = vsel %vm338, %v625, %v626
      %vm630 = vcmask 621568
      %v631 = vsel %vm630, %v618, %v629
      %v632 = vsel %vm338, %v627, %v628
      %v633 = vsel %vm630, %v622, %v632
      %636 = vst [vmem:[#allocation3 + $0xa0] sm:$0xff] %v631
      %637 = vst [vmem:[#allocation3 + $0xa8] sm:$0xff] %v633
      %v638 = vld [vmem:[#allocation2] sm:$0xff]
      %v639 = vld [vmem:[#allocation2 + $0x8] sm:$0xf]
      %v640 = vld [vmem:[#allocation2 + $0x10] sm:$0xff]
      %v641 = vld [vmem:[#allocation2 + $0x18] sm:$0xf]
      %646 = vrot.lane.b32.xlu0 %v638, 74
      %v647 = vpop.permute.xlu0 %646
      %648 = vrot.lane.b32.xlu0 %v639, 74
      %v649 = vpop.permute.xlu0 %648
      %650 = vrot.lane.b32.xlu0 %v640, 74
      %v651 = vpop.permute.xlu0 %650
      %652 = vrot.lane.b32.xlu0 %v641, 74
      %v653 = vpop.permute.xlu0 %652
      %v654 = vrot.slane %v647, 4
      %v655 = vrot.slane %v649, 4
      %v656 = vrot.slane %v651, 4
      %v657 = vrot.slane %v653, 4
      %v658 = vsel %vm338, %v654, %v655
      %vm659 = vcmask 605184
      %v660 = vsel %vm659, %v647, %v658
      %v661 = vsel %vm338, %v656, %v657
      %v662 = vsel %vm659, %v651, %v661
      %665 = vst [vmem:[#allocation3 + $0xb0] sm:$0xff] %v660
      %666 = vst [vmem:[#allocation3 + $0xb8] sm:$0xff] %v662
      %v667 = vld [vmem:[#allocation2] sm:$0xff]
      %v668 = vld [vmem:[#allocation2 + $0x8] sm:$0xf]
      %v669 = vld [vmem:[#allocation2 + $0x10] sm:$0xff]
      %v670 = vld [vmem:[#allocation2 + $0x18] sm:$0xf]
      %675 = vrot.lane.b32.xlu0 %v667, 30
      %v676 = vpop.permute.xlu0 %675
      %677 = vrot.lane.b32.xlu0 %v668, 30
      %v678 = vpop.permute.xlu0 %677
      %679 = vrot.lane.b32.xlu0 %v669, 30
      %v680 = vpop.permute.xlu0 %679
      %681 = vrot.lane.b32.xlu0 %v670, 30
      %v682 = vpop.permute.xlu0 %681
      %v683 = vrot.slane %v676, 4
      %v684 = vrot.slane %v678, 4
      %v685 = vrot.slane %v680, 4
      %v686 = vrot.slane %v682, 4
      %v687 = vsel %vm338, %v683, %v684
      %vm688 = vcmask 244736
      %v689 = vsel %vm688, %v676, %v687
      %v690 = vsel %vm338, %v685, %v686
      %v691 = vsel %vm688, %v680, %v690
      %694 = vst [vmem:[#allocation3 + $0xc0] sm:$0xff] %v689
      %695 = vst [vmem:[#allocation3 + $0xc8] sm:$0xff] %v691
      %v696 = vld [vmem:[#allocation2] sm:$0xff]
      %v697 = vld [vmem:[#allocation2 + $0x8] sm:$0xf]
      %v698 = vld [vmem:[#allocation2 + $0x10] sm:$0xff]
      %v699 = vld [vmem:[#allocation2 + $0x18] sm:$0xf]
      %704 = vrot.lane.b32.xlu0 %v696, 28
      %v705 = vpop.permute.xlu0 %704
      %706 = vrot.lane.b32.xlu0 %v697, 28
      %v707 = vpop.permute.xlu0 %706
      %708 = vrot.lane.b32.xlu0 %v698, 28
      %v709 = vpop.permute.xlu0 %708
      %710 = vrot.lane.b32.xlu0 %v699, 28
      %v711 = vpop.permute.xlu0 %710
      %v712 = vrot.slane %v705, 4
      %v713 = vrot.slane %v707, 4
      %v714 = vrot.slane %v709, 4
      %v715 = vrot.slane %v711, 4
      %v716 = vsel %vm338, %v712, %v713
      %v717 = vsel %vm456, %v705, %v716
      %v718 = vsel %vm338, %v714, %v715
      %v719 = vsel %vm456, %v709, %v718
      %722 = vst [vmem:[#allocation3 + $0xd0] sm:$0xff] %v717
      %723 = vst [vmem:[#allocation3 + $0xd8] sm:$0xff] %v719
      %v724 = vld [vmem:[#allocation2] sm:$0xff]
      %v725 = vld [vmem:[#allocation2 + $0x8] sm:$0xf]
      %v726 = vld [vmem:[#allocation2 + $0x10] sm:$0xff]
      %v727 = vld [vmem:[#allocation2 + $0x18] sm:$0xf]
      %732 = vrot.lane.b32.xlu0 %v724, 26
      %v733 = vpop.permute.xlu0 %732
      %734 = vrot.lane.b32.xlu0 %v725, 26
      %v735 = vpop.permute.xlu0 %734
      %736 = vrot.lane.b32.xlu0 %v726, 26
      %v737 = vpop.permute.xlu0 %736
      %738 = vrot.lane.b32.xlu0 %v727, 26
      %v739 = vpop.permute.xlu0 %738
      %v740 = vrot.slane %v733, 4
      %v741 = vrot.slane %v735, 4
      %v742 = vrot.slane %v737, 4
      %v743 = vrot.slane %v739, 4
      %v744 = vsel %vm338, %v740, %v741
      %vm745 = vcmask 211968
      %v746 = vsel %vm745, %v733, %v744
      %v747 = vsel %vm338, %v742, %v743
      %v748 = vsel %vm745, %v737, %v747
      %751 = vst [vmem:[#allocation3 + $0xe0] sm:$0xff] %v746
      %752 = vst [vmem:[#allocation3 + $0xe8] sm:$0xff] %v748
      %v753 = vld [vmem:[#allocation2 + $0x4] sm:$0xff]
      %v754 = vld [vmem:[#allocation2 + $0xc] sm:$0xf]
      %v755 = vld [vmem:[#allocation2 + $0x14] sm:$0xff]
      %v756 = vld [vmem:[#allocation2 + $0x1c] sm:$0xf]
      %761 = vrot.lane.b32.xlu0 %v753, 110
      %v762 = vpop.permute.xlu0 %761
      %763 = vrot.lane.b32.xlu0 %v754, 110
      %v764 = vpop.permute.xlu0 %763
      %765 = vrot.lane.b32.xlu0 %v755, 110
      %v766 = vpop.permute.xlu0 %765
      %767 = vrot.lane.b32.xlu0 %v756, 110
      %v768 = vpop.permute.xlu0 %767
      %v769 = vrot.slane %v762, 4
      %v770 = vrot.slane %v764, 4
      %v771 = vrot.slane %v766, 4
      %v772 = vrot.slane %v768, 4
      %v773 = vsel %vm338, %v769, %v770
      %vm774 = vcmask 900096
      %v775 = vsel %vm774, %v762, %v773
      %v776 = vsel %vm338, %v771, %v772
      %v777 = vsel %vm774, %v766, %v776
      %780 = vst [vmem:[#allocation3 + $0xf0] sm:$0xff] %v775
      %781 = vst [vmem:[#allocation3 + $0xf8] sm:$0xff] %v777
      %v782 = vld [vmem:[#allocation2 + $0x4] sm:$0xff]
      %v783 = vld [vmem:[#allocation2 + $0xc] sm:$0xf]
      %v784 = vld [vmem:[#allocation2 + $0x14] sm:$0xff]
      %v785 = vld [vmem:[#allocation2 + $0x1c] sm:$0xf]
      %790 = vrot.lane.b32.xlu0 %v782, 108
      %v791 = vpop.permute.xlu0 %790
      %792 = vrot.lane.b32.xlu0 %v783, 108
      %v793 = vpop.permute.xlu0 %792
      %794 = vrot.lane.b32.xlu0 %v784, 108
      %v795 = vpop.permute.xlu0 %794
      %796 = vrot.lane.b32.xlu0 %v785, 108
      %v797 = vpop.permute.xlu0 %796
      %v798 = vrot.slane %v791, 4
      %v799 = vrot.slane %v793, 4
      %v800 = vrot.slane %v795, 4
      %v801 = vrot.slane %v797, 4
      %v802 = vsel %vm338, %v798, %v799
      %vm803 = vcmask 883712
      %v804 = vsel %vm803, %v791, %v802
      %v805 = vsel %vm338, %v800, %v801
      %v806 = vsel %vm803, %v795, %v805
      %809 = vst [vmem:[#allocation3 + $0x100] sm:$0xff] %v804
      %810 = vst [vmem:[#allocation3 + $0x108] sm:$0xff] %v806
      %v811 = vld [vmem:[#allocation2 + $0x4] sm:$0xff]
      %v812 = vld [vmem:[#allocation2 + $0xc] sm:$0xf]
      %v813 = vld [vmem:[#allocation2 + $0x14] sm:$0xff]
      %v814 = vld [vmem:[#allocation2 + $0x1c] sm:$0xf]
      %819 = vrot.lane.b32.xlu0 %v811, 106
      %v820 = vpop.permute.xlu0 %819
      %821 = vrot.lane.b32.xlu0 %v812, 106
      %v822 = vpop.permute.xlu0 %821
      %823 = vrot.lane.b32.xlu0 %v813, 106
      %v824 = vpop.permute.xlu0 %823
      %825 = vrot.lane.b32.xlu0 %v814, 106
      %v826 = vpop.permute.xlu0 %825
      %v827 = vrot.slane %v820, 4
      %v828 = vrot.slane %v822, 4
      %v829 = vrot.slane %v824, 4
      %v830 = vrot.slane %v826, 4
      %v831 = vsel %vm338, %v827, %v828
      %vm832 = vcmask 867328
      %v833 = vsel %vm832, %v820, %v831
      %v834 = vsel %vm338, %v829, %v830
      %v835 = vsel %vm832, %v824, %v834
      %838 = vst [vmem:[#allocation3 + $0x110] sm:$0xff] %v833
      %839 = vst [vmem:[#allocation3 + $0x118] sm:$0xff] %v835
      %v840 = vld [vmem:[#allocation2] sm:$0xff]
      %v841 = vld [vmem:[#allocation2 + $0x8] sm:$0xf]
      %v842 = vld [vmem:[#allocation2 + $0x10] sm:$0xff]
      %v843 = vld [vmem:[#allocation2 + $0x18] sm:$0xf]
      %848 = vrot.lane.b32.xlu0 %v840, 103
      %v849 = vpop.permute.xlu0 %848
      %850 = vrot.lane.b32.xlu0 %v841, 103
      %v851 = vpop.permute.xlu0 %850
      %852 = vrot.lane.b32.xlu0 %v842, 103
      %v853 = vpop.permute.xlu0 %852
      %854 = vrot.lane.b32.xlu0 %v843, 103
      %v855 = vpop.permute.xlu0 %854
      %v856 = vrot.slane %v849, 4
      %v857 = vrot.slane %v851, 4
      %v858 = vrot.slane %v853, 4
      %v859 = vrot.slane %v855, 4
      %v860 = vsel %vm338, %v856, %v857
      %vm861 = vcmask 842752
      %v862 = vsel %vm861, %v849, %v860
      %v863 = vsel %vm338, %v858, %v859
      %v864 = vsel %vm861, %v853, %v863
      %867 = vst [vmem:[#allocation3 + $0x120] sm:$0xff] %v862
      %868 = vst [vmem:[#allocation3 + $0x128] sm:$0xff] %v864
      %v869 = vld [vmem:[#allocation2] sm:$0xff]
      %v870 = vld [vmem:[#allocation2 + $0x8] sm:$0xf]
      %v871 = vld [vmem:[#allocation2 + $0x10] sm:$0xff]
      %v872 = vld [vmem:[#allocation2 + $0x18] sm:$0xf]
      %877 = vrot.lane.b32.xlu0 %v869, 100
      %v878 = vpop.permute.xlu0 %877
      %879 = vrot.lane.b32.xlu0 %v870, 100
      %v880 = vpop.permute.xlu0 %879
      %881 = vrot.lane.b32.xlu0 %v871, 100
      %v882 = vpop.permute.xlu0 %881
      %883 = vrot.lane.b32.xlu0 %v872, 100
      %v884 = vpop.permute.xlu0 %883
      %v885 = vrot.slane %v878, 4
      %v886 = vrot.slane %v880, 4
      %v887 = vrot.slane %v882, 4
      %v888 = vrot.slane %v884, 4
      %v889 = vsel %vm338, %v885, %v886
      %vm890 = vcmask 818176
      %v891 = vsel %vm890, %v878, %v889
      %v892 = vsel %vm338, %v887, %v888
      %v893 = vsel %vm890, %v882, %v892
      %896 = vst [vmem:[#allocation3 + $0x130] sm:$0xff] %v891
      %897 = vst [vmem:[#allocation3 + $0x138] sm:$0xff] %v893
      %v898 = vld [vmem:[#allocation2] sm:$0xff]
      %v899 = vld [vmem:[#allocation2 + $0x8] sm:$0xf]
      %v900 = vld [vmem:[#allocation2 + $0x10] sm:$0xff]
      %v901 = vld [vmem:[#allocation2 + $0x18] sm:$0xf]
      %906 = vrot.lane.b32.xlu0 %v898, 97
      %v907 = vpop.permute.xlu0 %906
      %908 = vrot.lane.b32.xlu0 %v899, 97
      %v909 = vpop.permute.xlu0 %908
      %910 = vrot.lane.b32.xlu0 %v900, 97
      %v911 = vpop.permute.xlu0 %910
      %912 = vrot.lane.b32.xlu0 %v901, 97
      %v913 = vpop.permute.xlu0 %912
      %v914 = vrot.slane %v907, 4
      %v915 = vrot.slane %v909, 4
      %v916 = vrot.slane %v911, 4
      %v917 = vrot.slane %v913, 4
      %v918 = vsel %vm338, %v914, %v915
      %vm919 = vcmask 793600
      %v920 = vsel %vm919, %v907, %v918
      %v921 = vsel %vm338, %v916, %v917
      %v922 = vsel %vm919, %v911, %v921
      %925 = vst [vmem:[#allocation3 + $0x140] sm:$0xff] %v920
      %926 = vst [vmem:[#allocation3 + $0x148] sm:$0xff] %v922
      %v927 = vld [vmem:[#allocation2] sm:$0xff]
      %v928 = vld [vmem:[#allocation2 + $0x8] sm:$0xf]
      %v929 = vld [vmem:[#allocation2 + $0x10] sm:$0xff]
      %v930 = vld [vmem:[#allocation2 + $0x18] sm:$0xf]
      %935 = vrot.lane.b32.xlu0 %v927, 31
      %v936 = vpop.permute.xlu0 %935
      %937 = vrot.lane.b32.xlu0 %v928, 31
      %v938 = vpop.permute.xlu0 %937
      %939 = vrot.lane.b32.xlu0 %v929, 31
      %v940 = vpop.permute.xlu0 %939
      %941 = vrot.lane.b32.xlu0 %v930, 31
      %v942 = vpop.permute.xlu0 %941
      %v943 = vrot.slane %v936, 4
      %v944 = vrot.slane %v938, 4
      %v945 = vrot.slane %v940, 4
      %v946 = vrot.slane %v942, 4
      %v947 = vsel %vm338, %v943, %v944
      %vm948 = vcmask 252928
      %v949 = vsel %vm948, %v936, %v947
      %v950 = vsel %vm338, %v945, %v946
      %v951 = vsel %vm948, %v940, %v950
      %954 = vst [vmem:[#allocation3 + $0x150] sm:$0xff] %v949
      %955 = vst [vmem:[#allocation3 + $0x158] sm:$0xff] %v951
      %v956 = vld [vmem:[#allocation2] sm:$0xff]
      %v957 = vld [vmem:[#allocation2 + $0x8] sm:$0xf]
      %v958 = vld [vmem:[#allocation2 + $0x10] sm:$0xff]
      %v959 = vld [vmem:[#allocation2 + $0x18] sm:$0xf]
      %964 = vrot.lane.b32.xlu0 %v956, 28
      %v965 = vpop.permute.xlu0 %964
      %966 = vrot.lane.b32.xlu0 %v957, 28
      %v967 = vpop.permute.xlu0 %966
      %968 = vrot.lane.b32.xlu0 %v958, 28
      %v969 = vpop.permute.xlu0 %968
      %970 = vrot.lane.b32.xlu0 %v959, 28
      %v971 = vpop.permute.xlu0 %970
      %v972 = vrot.slane %v965, 4
      %v973 = vrot.slane %v967, 4
      %v974 = vrot.slane %v969, 4
      %v975 = vrot.slane %v971, 4
      %v976 = vsel %vm338, %v972, %v973
      %v977 = vsel %vm456, %v965, %v976
      %v978 = vsel %vm338, %v974, %v975
      %v979 = vsel %vm456, %v969, %v978
      %982 = vst [vmem:[#allocation3 + $0x160] sm:$0xff] %v977
      %983 = vst [vmem:[#allocation3 + $0x168] sm:$0xff] %v979
      %v984 = vld [vmem:[#allocation2] sm:$0xff]
      %v985 = vld [vmem:[#allocation2 + $0x8] sm:$0xf]
      %v986 = vld [vmem:[#allocation2 + $0x10] sm:$0xff]
      %v987 = vld [vmem:[#allocation2 + $0x18] sm:$0xf]
      %992 = vrot.lane.b32.xlu0 %v984, 25
      %v993 = vpop.permute.xlu0 %992
      %994 = vrot.lane.b32.xlu0 %v985, 25
      %v995 = vpop.permute.xlu0 %994
      %996 = vrot.lane.b32.xlu0 %v986, 25
      %v997 = vpop.permute.xlu0 %996
      %998 = vrot.lane.b32.xlu0 %v987, 25
      %v999 = vpop.permute.xlu0 %998
      %v1000 = vrot.slane %v993, 4
      %v1001 = vrot.slane %v995, 4
      %v1002 = vrot.slane %v997, 4
      %v1003 = vrot.slane %v999, 4
      %v1004 = vsel %vm338, %v1000, %v1001
      %vm1005 = vcmask 203776
      %v1006 = vsel %vm1005, %v993, %v1004
      %v1007 = vsel %vm338, %v1002, %v1003
      %v1008 = vsel %vm1005, %v997, %v1007
      %1011 = vst [vmem:[#allocation3 + $0x170] sm:$0xff] %v1006
      %1012 = vst [vmem:[#allocation3 + $0x178] sm:$0xff] %v1008
      %v1013 = vld [vmem:[#allocation2 + $0x4] sm:$0xff]
      %v1014 = vld [vmem:[#allocation2 + $0xc] sm:$0xf]
      %v1015 = vld [vmem:[#allocation2 + $0x14] sm:$0xff]
      %v1016 = vld [vmem:[#allocation2 + $0x1c] sm:$0xf]
      %1021 = vrot.lane.b32.xlu0 %v1013, 87
      %v1022 = vpop.permute.xlu0 %1021
      %1023 = vrot.lane.b32.xlu0 %v1014, 87
      %v1024 = vpop.permute.xlu0 %1023
      %1025 = vrot.lane.b32.xlu0 %v1015, 87
      %v1026 = vpop.permute.xlu0 %1025
      %1027 = vrot.lane.b32.xlu0 %v1016, 87
      %v1028 = vpop.permute.xlu0 %1027
      %v1029 = vrot.slane %v1022, 4
      %v1030 = vrot.slane %v1024, 4
      %v1031 = vrot.slane %v1026, 4
      %v1032 = vrot.slane %v1028, 4
      %v1033 = vsel %vm338, %v1029, %v1030
      %vm1034 = vcmask 711680
      %v1035 = vsel %vm1034, %v1022, %v1033
      %v1036 = vsel %vm338, %v1031, %v1032
      %v1037 = vsel %vm1034, %v1026, %v1036
      %1040 = vst [vmem:[#allocation3 + $0x180] sm:$0xff] %v1035
      %1041 = vst [vmem:[#allocation3 + $0x188] sm:$0xff] %v1037
      %v1042 = vld [vmem:[#allocation2 + $0x4] sm:$0xff]
      %v1043 = vld [vmem:[#allocation2 + $0xc] sm:$0xf]
      %v1044 = vld [vmem:[#allocation2 + $0x14] sm:$0xff]
      %v1045 = vld [vmem:[#allocation2 + $0x1c] sm:$0xf]
      %1050 = vrot.lane.b32.xlu0 %v1042, 84
      %v1051 = vpop.permute.xlu0 %1050
      %1052 = vrot.lane.b32.xlu0 %v1043, 84
      %v1053 = vpop.permute.xlu0 %1052
      %1054 = vrot.lane.b32.xlu0 %v1044, 84
      %v1055 = vpop.permute.xlu0 %1054
      %1056 = vrot.lane.b32.xlu0 %v1045, 84
      %v1057 = vpop.permute.xlu0 %1056
      %v1058 = vrot.slane %v1051, 4
      %v1059 = vrot.slane %v1053, 4
      %v1060 = vrot.slane %v1055, 4
      %v1061 = vrot.slane %v1057, 4
      %v1062 = vsel %vm338, %v1058, %v1059
      %vm1063 = vcmask 687104
      %v1064 = vsel %vm1063, %v1051, %v1062
      %v1065 = vsel %vm338, %v1060, %v1061
      %v1066 = vsel %vm1063, %v1055, %v1065
      %1069 = vst [vmem:[#allocation3 + $0x190] sm:$0xff] %v1064
      %1070 = vst [vmem:[#allocation3 + $0x198] sm:$0xff] %v1066
      %v1071 = vld [vmem:[#allocation2 + $0x4] sm:$0xff]
      %v1072 = vld [vmem:[#allocation2 + $0xc] sm:$0xf]
      %v1073 = vld [vmem:[#allocation2 + $0x14] sm:$0xff]
      %v1074 = vld [vmem:[#allocation2 + $0x1c] sm:$0xf]
      %1079 = vrot.lane.b32.xlu0 %v1071, 81
      %v1080 = vpop.permute.xlu0 %1079
      %1081 = vrot.lane.b32.xlu0 %v1072, 81
      %v1082 = vpop.permute.xlu0 %1081
      %1083 = vrot.lane.b32.xlu0 %v1073, 81
      %v1084 = vpop.permute.xlu0 %1083
      %1085 = vrot.lane.b32.xlu0 %v1074, 81
      %v1086 = vpop.permute.xlu0 %1085
      %v1087 = vrot.slane %v1080, 4
      %v1088 = vrot.slane %v1082, 4
      %v1089 = vrot.slane %v1084, 4
      %v1090 = vrot.slane %v1086, 4
      %v1091 = vsel %vm338, %v1087, %v1088
      %vm1092 = vcmask 662528
      %v1093 = vsel %vm1092, %v1080, %v1091
      %v1094 = vsel %vm338, %v1089, %v1090
      %v1095 = vsel %vm1092, %v1084, %v1094
      %1098 = vst [vmem:[#allocation3 + $0x1a0] sm:$0xff] %v1093
      %1099 = vst [vmem:[#allocation3 + $0x1a8] sm:$0xff] %v1095
      %v1100 = vld [vmem:[#allocation2] sm:$0xff]
      %v1101 = vld [vmem:[#allocation2 + $0x10] sm:$0xff]
      %1102 = vst [vmem:[#allocation3 + $0x1b0] sm:$0xff] %v1100
      %1103 = vst [vmem:[#allocation3 + $0x1b8] sm:$0xff] %v1101
      %v1104 = vld [vmem:[#allocation2] sm:$0xff]
      %v1105 = vld [vmem:[#allocation2 + $0x8] sm:$0xf]
      %v1106 = vld [vmem:[#allocation2 + $0x10] sm:$0xff]
      %v1107 = vld [vmem:[#allocation2 + $0x18] sm:$0xf]
      %1112 = vrot.lane.b32.xlu0 %v1104, 124
      %v1113 = vpop.permute.xlu0 %1112
      %1114 = vrot.lane.b32.xlu0 %v1105, 124
      %v1115 = vpop.permute.xlu0 %1114
      %1116 = vrot.lane.b32.xlu0 %v1106, 124
      %v1117 = vpop.permute.xlu0 %1116
      %1118 = vrot.lane.b32.xlu0 %v1107, 124
      %v1119 = vpop.permute.xlu0 %1118
      %v1120 = vrot.slane %v1113, 4
      %v1121 = vrot.slane %v1115, 4
      %v1122 = vrot.slane %v1117, 4
      %v1123 = vrot.slane %v1119, 4
      %v1124 = vsel %vm338, %v1120, %v1121
      %vm1125 = vcmask 1014784
      %v1126 = vsel %vm1125, %v1113, %v1124
      %v1127 = vsel %vm338, %v1122, %v1123
      %v1128 = vsel %vm1125, %v1117, %v1127
      %1131 = vst [vmem:[#allocation3 + $0x1c0] sm:$0xff] %v1126
      %1132 = vst [vmem:[#allocation3 + $0x1c8] sm:$0xff] %v1128
      %v1133 = vld [vmem:[#allocation2] sm:$0xff]
      %v1134 = vld [vmem:[#allocation2 + $0x8] sm:$0xf]
      %v1135 = vld [vmem:[#allocation2 + $0x10] sm:$0xff]
      %v1136 = vld [vmem:[#allocation2 + $0x18] sm:$0xf]
      %1141 = vrot.lane.b32.xlu0 %v1133, 120
      %v1142 = vpop.permute.xlu0 %1141
      %1143 = vrot.lane.b32.xlu0 %v1134, 120
      %v1144 = vpop.permute.xlu0 %1143
      %1145 = vrot.lane.b32.xlu0 %v1135, 120
      %v1146 = vpop.permute.xlu0 %1145
      %1147 = vrot.lane.b32.xlu0 %v1136, 120
      %v1148 = vpop.permute.xlu0 %1147
      %v1149 = vrot.slane %v1142, 4
      %v1150 = vrot.slane %v1144, 4
      %v1151 = vrot.slane %v1146, 4
      %v1152 = vrot.slane %v1148, 4
      %v1153 = vsel %vm338, %v1149, %v1150
      %vm1154 = vcmask 982016
      %v1155 = vsel %vm1154, %v1142, %v1153
      %v1156 = vsel %vm338, %v1151, %v1152
      %v1157 = vsel %vm1154, %v1146, %v1156
      %1160 = vst [vmem:[#allocation3 + $0x1d0] sm:$0xff] %v1155
      %1161 = vst [vmem:[#allocation3 + $0x1d8] sm:$0xff] %v1157
      %v1162 = vld [vmem:[#allocation2] sm:$0xff]
      %v1163 = vld [vmem:[#allocation2 + $0x8] sm:$0xf]
      %v1164 = vld [vmem:[#allocation2 + $0x10] sm:$0xff]
      %v1165 = vld [vmem:[#allocation2 + $0x18] sm:$0xf]
      %1170 = vrot.lane.b32.xlu0 %v1162, 32
      %v1171 = vpop.permute.xlu0 %1170
      %1172 = vrot.lane.b32.xlu0 %v1163, 32
      %v1173 = vpop.permute.xlu0 %1172
      %1174 = vrot.lane.b32.xlu0 %v1164, 32
      %v1175 = vpop.permute.xlu0 %1174
      %1176 = vrot.lane.b32.xlu0 %v1165, 32
      %v1177 = vpop.permute.xlu0 %1176
      %v1178 = vrot.slane %v1171, 4
      %v1179 = vrot.slane %v1173, 4
      %v1180 = vrot.slane %v1175, 4
      %v1181 = vrot.slane %v1177, 4
      %v1182 = vsel %vm338, %v1178, %v1179
      %vm1183 = vcmask 261120
      %v1184 = vsel %vm1183, %v1171, %v1182
      %v1185 = vsel %vm338, %v1180, %v1181
      %v1186 = vsel %vm1183, %v1175, %v1185
      %1189 = vst [vmem:[#allocation3 + $0x1e0] sm:$0xff] %v1184
      %1190 = vst [vmem:[#allocation3 + $0x1e8] sm:$0xff] %v1186
      %v1191 = vld [vmem:[#allocation2] sm:$0xff]
      %v1192 = vld [vmem:[#allocation2 + $0x8] sm:$0xf]
      %v1193 = vld [vmem:[#allocation2 + $0x10] sm:$0xff]
      %v1194 = vld [vmem:[#allocation2 + $0x18] sm:$0xf]
      %1199 = vrot.lane.b32.xlu0 %v1191, 28
      %v1200 = vpop.permute.xlu0 %1199
      %1201 = vrot.lane.b32.xlu0 %v1192, 28
      %v1202 = vpop.permute.xlu0 %1201
      %1203 = vrot.lane.b32.xlu0 %v1193, 28
      %v1204 = vpop.permute.xlu0 %1203
      %1205 = vrot.lane.b32.xlu0 %v1194, 28
      %v1206 = vpop.permute.xlu0 %1205
      %v1207 = vrot.slane %v1200, 4
      %v1208 = vrot.slane %v1202, 4
      %v1209 = vrot.slane %v1204, 4
      %v1210 = vrot.slane %v1206, 4
      %v1211 = vsel %vm338, %v1207, %v1208
      %v1212 = vsel %vm456, %v1200, %v1211
      %v1213 = vsel %vm338, %v1209, %v1210
      %v1214 = vsel %vm456, %v1204, %v1213
      %1217 = vst [vmem:[#allocation3 + $0x1f0] sm:$0xff] %v1212
      %1218 = vst [vmem:[#allocation3 + $0x1f8] sm:$0xff] %v1214
      %v1219 = vld [vmem:[#allocation2] sm:$0xff]
      %v1220 = vld [vmem:[#allocation2 + $0x8] sm:$0xf]
      %v1221 = vld [vmem:[#allocation2 + $0x10] sm:$0xff]
      %v1222 = vld [vmem:[#allocation2 + $0x18] sm:$0xf]
      %1227 = vrot.lane.b32.xlu0 %v1219, 24
      %v1228 = vpop.permute.xlu0 %1227
      %1229 = vrot.lane.b32.xlu0 %v1220, 24
      %v1230 = vpop.permute.xlu0 %1229
      %1231 = vrot.lane.b32.xlu0 %v1221, 24
      %v1232 = vpop.permute.xlu0 %1231
      %1233 = vrot.lane.b32.xlu0 %v1222, 24
      %v1234 = vpop.permute.xlu0 %1233
      %v1235 = vrot.slane %v1228, 4
      %v1236 = vrot.slane %v1230, 4
      %v1237 = vrot.slane %v1232, 4
      %v1238 = vrot.slane %v1234, 4
      %v1239 = vsel %vm338, %v1235, %v1236
      %vm1240 = vcmask 195584
      %v1241 = vsel %vm1240, %v1228, %v1239
      %v1242 = vsel %vm338, %v1237, %v1238
      %v1243 = vsel %vm1240, %v1232, %v1242
      %1246 = vst [vmem:[#allocation3 + $0x200] sm:$0xff] %v1241
      %1247 = vst [vmem:[#allocation3 + $0x208] sm:$0xff] %v1243
      %v1248 = vld [vmem:[#allocation2 + $0x4] sm:$0xff]
      %v1249 = vld [vmem:[#allocation2 + $0xc] sm:$0xf]
      %v1250 = vld [vmem:[#allocation2 + $0x14] sm:$0xff]
      %v1251 = vld [vmem:[#allocation2 + $0x1c] sm:$0xf]
      %1256 = vrot.lane.b32.xlu0 %v1248, 64
      %v1257 = vpop.permute.xlu0 %1256
      %1258 = vrot.lane.b32.xlu0 %v1249, 64
      %v1259 = vpop.permute.xlu0 %1258
      %1260 = vrot.lane.b32.xlu0 %v1250, 64
      %v1261 = vpop.permute.xlu0 %1260
      %1262 = vrot.lane.b32.xlu0 %v1251, 64
      %v1263 = vpop.permute.xlu0 %1262
      %v1264 = vrot.slane %v1257, 4
      %v1265 = vrot.slane %v1259, 4
      %v1266 = vrot.slane %v1261, 4
      %v1267 = vrot.slane %v1263, 4
      %v1268 = vsel %vm338, %v1264, %v1265
      %vm1269 = vcmask 523264
      %v1270 = vsel %vm1269, %v1257, %v1268
      %v1271 = vsel %vm338, %v1266, %v1267
      %v1272 = vsel %vm1269, %v1261, %v1271
      %1275 = vst [vmem:[#allocation3 + $0x210] sm:$0xff] %v1270
      %1276 = vst [vmem:[#allocation3 + $0x218] sm:$0xff] %v1272
      %v1277 = vld [vmem:[#allocation2 + $0x4] sm:$0xff]
      %v1278 = vld [vmem:[#allocation2 + $0xc] sm:$0xf]
      %v1279 = vld [vmem:[#allocation2 + $0x14] sm:$0xff]
      %v1280 = vld [vmem:[#allocation2 + $0x1c] sm:$0xf]
      %1285 = vrot.lane.b32.xlu0 %v1277, 60
      %v1286 = vpop.permute.xlu0 %1285
      %1287 = vrot.lane.b32.xlu0 %v1278, 60
      %v1288 = vpop.permute.xlu0 %1287
      %1289 = vrot.lane.b32.xlu0 %v1279, 60
      %v1290 = vpop.permute.xlu0 %1289
      %1291 = vrot.lane.b32.xlu0 %v1280, 60
      %v1292 = vpop.permute.xlu0 %1291
      %v1293 = vrot.slane %v1286, 4
      %v1294 = vrot.slane %v1288, 4
      %v1295 = vrot.slane %v1290, 4
      %v1296 = vrot.slane %v1292, 4
      %v1297 = vsel %vm338, %v1293, %v1294
      %vm1298 = vcmask 490496
      %v1299 = vsel %vm1298, %v1286, %v1297
      %v1300 = vsel %vm338, %v1295, %v1296
      %v1301 = vsel %vm1298, %v1290, %v1300
      %1304 = vst [vmem:[#allocation3 + $0x220] sm:$0xff] %v1299
      %1305 = vst [vmem:[#allocation3 + $0x228] sm:$0xff] %v1301
      %v1306 = vld [vmem:[#allocation2 + $0x4] sm:$0xff]
      %v1307 = vld [vmem:[#allocation2 + $0xc] sm:$0xf]
      %v1308 = vld [vmem:[#allocation2 + $0x14] sm:$0xff]
      %v1309 = vld [vmem:[#allocation2 + $0x1c] sm:$0xf]
      %1314 = vrot.lane.b32.xlu0 %v1306, 56
      %v1315 = vpop.permute.xlu0 %1314
      %1316 = vrot.lane.b32.xlu0 %v1307, 56
      %v1317 = vpop.permute.xlu0 %1316
      %1318 = vrot.lane.b32.xlu0 %v1308, 56
      %v1319 = vpop.permute.xlu0 %1318
      %1320 = vrot.lane.b32.xlu0 %v1309, 56
      %v1321 = vpop.permute.xlu0 %1320
      %v1322 = vrot.slane %v1315, 4
      %v1323 = vrot.slane %v1317, 4
      %v1324 = vrot.slane %v1319, 4
      %v1325 = vrot.slane %v1321, 4
      %v1326 = vsel %vm338, %v1322, %v1323
      %vm1327 = vcmask 457728
      %v1328 = vsel %vm1327, %v1315, %v1326
      %v1329 = vsel %vm338, %v1324, %v1325
      %v1330 = vsel %vm1327, %v1319, %v1329
      %1333 = vst [vmem:[#allocation3 + $0x230] sm:$0xff] %v1328
      %1334 = vst [vmem:[#allocation3 + $0x238] sm:$0xff] %v1330
      %v1335 = vld [vmem:[%s1] sm:$0xff]
      %v1336 = vld [vmem:[%s1 + $0x8] sm:$0xff]
      %v1337 = vld [vmem:[%s1 + $0x10] sm:$0xf]
      %v1338 = vld [vmem:[%s1 + $0x14] sm:$0xff]
      %v1339 = vld [vmem:[%s1 + $0x1c] sm:$0xff]
      %v1340 = vld [vmem:[%s1 + $0x24] sm:$0xf]
      %v1341 = vld [vmem:[%s1 + $0x28] sm:$0xff]
      %v1342 = vld [vmem:[%s1 + $0x30] sm:$0xff]
      %v1343 = vld [vmem:[%s1 + $0x38] sm:$0xf]
      %v1344 = vld [vmem:[%s1 + $0x3c] sm:$0xff]
      %v1345 = vld [vmem:[%s1 + $0x44] sm:$0xff]
      %v1346 = vld [vmem:[%s1 + $0x4c] sm:$0xf]
      %v1347 = vld [vmem:[#allocation3] sm:$0xff]
      %v1348 = vld [vmem:[#allocation3 + $0x8] sm:$0xff]
      %v1349 = vld [vmem:[#allocation3 + $0x10] sm:$0xff]
      %v1350 = vld [vmem:[#allocation3 + $0x18] sm:$0xff]
      %v1351 = vld [vmem:[#allocation3 + $0x20] sm:$0xff]
      %v1352 = vld [vmem:[#allocation3 + $0x28] sm:$0xff]
      %v1353 = vld [vmem:[#allocation3 + $0x30] sm:$0xff]
      %v1354 = vld [vmem:[#allocation3 + $0x38] sm:$0xff]
      %v1355 = vld [vmem:[#allocation3 + $0x40] sm:$0xff]
      %v1356 = vld [vmem:[#allocation3 + $0x48] sm:$0xff]
      %v1357 = vld [vmem:[#allocation3 + $0x50] sm:$0xff]
      %v1358 = vld [vmem:[#allocation3 + $0x58] sm:$0xff]
      %v1359 = vld [vmem:[#allocation3 + $0x60] sm:$0xff]
      %v1360 = vld [vmem:[#allocation3 + $0x68] sm:$0xff]
      %v1361 = vld [vmem:[#allocation3 + $0x70] sm:$0xff]
      %v1362 = vld [vmem:[#allocation3 + $0x78] sm:$0xff]
      %v1363 = vld [vmem:[#allocation3 + $0x80] sm:$0xff]
      %v1364 = vld [vmem:[#allocation3 + $0x88] sm:$0xff]
      %v1365 = vld [vmem:[#allocation3 + $0x90] sm:$0xff]
      %v1366 = vld [vmem:[#allocation3 + $0x98] sm:$0xff]
      %v1367 = vld [vmem:[#allocation3 + $0xa0] sm:$0xff]
      %v1368 = vld [vmem:[#allocation3 + $0xa8] sm:$0xff]
      %v1369 = vld [vmem:[#allocation3 + $0xb0] sm:$0xff]
      %v1370 = vld [vmem:[#allocation3 + $0xb8] sm:$0xff]
      %v1371 = vld [vmem:[#allocation3 + $0xc0] sm:$0xff]
      %v1372 = vld [vmem:[#allocation3 + $0xc8] sm:$0xff]
      %v1373 = vld [vmem:[#allocation3 + $0xd0] sm:$0xff]
      %v1374 = vld [vmem:[#allocation3 + $0xd8] sm:$0xff]
      %v1375 = vld [vmem:[#allocation3 + $0xe0] sm:$0xff]
      %v1376 = vld [vmem:[#allocation3 + $0xe8] sm:$0xff]
      %v1377 = vld [vmem:[#allocation3 + $0xf0] sm:$0xff]
      %v1378 = vld [vmem:[#allocation3 + $0xf8] sm:$0xff]
      %v1379 = vld [vmem:[#allocation3 + $0x100] sm:$0xff]
      %v1380 = vld [vmem:[#allocation3 + $0x108] sm:$0xff]
      %v1381 = vld [vmem:[#allocation3 + $0x110] sm:$0xff]
      %v1382 = vld [vmem:[#allocation3 + $0x118] sm:$0xff]
      %v1383 = vld [vmem:[#allocation3 + $0x120] sm:$0xff]
      %v1384 = vld [vmem:[#allocation3 + $0x128] sm:$0xff]
      %v1385 = vld [vmem:[#allocation3 + $0x130] sm:$0xff]
      %v1386 = vld [vmem:[#allocation3 + $0x138] sm:$0xff]
      %v1387 = vld [vmem:[#allocation3 + $0x140] sm:$0xff]
      %v1388 = vld [vmem:[#allocation3 + $0x148] sm:$0xff]
      %v1389 = vld [vmem:[#allocation3 + $0x150] sm:$0xff]
      %v1390 = vld [vmem:[#allocation3 + $0x158] sm:$0xff]
      %v1391 = vld [vmem:[#allocation3 + $0x160] sm:$0xff]
      %v1392 = vld [vmem:[#allocation3 + $0x168] sm:$0xff]
      %v1393 = vld [vmem:[#allocation3 + $0x170] sm:$0xff]
      %v1394 = vld [vmem:[#allocation3 + $0x178] sm:$0xff]
      %v1395 = vld [vmem:[#allocation3 + $0x180] sm:$0xff]
      %v1396 = vld [vmem:[#allocation3 + $0x188] sm:$0xff]
      %v1397 = vld [vmem:[#allocation3 + $0x190] sm:$0xff]
      %v1398 = vld [vmem:[#allocation3 + $0x198] sm:$0xff]
      %v1399 = vld [vmem:[#allocation3 + $0x1a0] sm:$0xff]
      %v1400 = vld [vmem:[#allocation3 + $0x1a8] sm:$0xff]
      %v1401 = vld [vmem:[#allocation3 + $0x1b0] sm:$0xff]
      %v1402 = vld [vmem:[#allocation3 + $0x1b8] sm:$0xff]
      %v1403 = vld [vmem:[#allocation3 + $0x1c0] sm:$0xff]
      %v1404 = vld [vmem:[#allocation3 + $0x1c8] sm:$0xff]
      %v1405 = vld [vmem:[#allocation3 + $0x1d0] sm:$0xff]
      %v1406 = vld [vmem:[#allocation3 + $0x1d8] sm:$0xff]
      %v1407 = vld [vmem:[#allocation3 + $0x1e0] sm:$0xff]
      %v1408 = vld [vmem:[#allocation3 + $0x1e8] sm:$0xff]
      %v1409 = vld [vmem:[#allocation3 + $0x1f0] sm:$0xff]
      %v1410 = vld [vmem:[#allocation3 + $0x1f8] sm:$0xff]
      %v1411 = vld [vmem:[#allocation3 + $0x200] sm:$0xff]
      %v1412 = vld [vmem:[#allocation3 + $0x208] sm:$0xff]
      %v1413 = vld [vmem:[#allocation3 + $0x210] sm:$0xff]
      %v1414 = vld [vmem:[#allocation3 + $0x218] sm:$0xff]
      %v1415 = vld [vmem:[#allocation3 + $0x220] sm:$0xff]
      %v1416 = vld [vmem:[#allocation3 + $0x228] sm:$0xff]
      %v1417 = vld [vmem:[#allocation3 + $0x230] sm:$0xff]
      %v1418 = vld [vmem:[#allocation3 + $0x238] sm:$0xff]
      %v1431 = vunpack.c.l.b16 %v1335
      %v1432 = vunpack.c.h.b16 %v1335
      %v1433 = vunpack.c.l.b16 %v1336
      %v1434 = vunpack.c.h.b16 %v1336
      %v1435 = vunpack.c.l.b16 %v1337
      %v1436 = vunpack.c.l.b16 %v1338
      %v1437 = vunpack.c.h.b16 %v1338
      %v1438 = vunpack.c.l.b16 %v1339
      %v1439 = vunpack.c.h.b16 %v1339
      %v1440 = vunpack.c.l.b16 %v1340
      %v1441 = vunpack.c.l.b16 %v1341
      %v1442 = vunpack.c.h.b16 %v1341
      %v1443 = vunpack.c.l.b16 %v1342
      %v1444 = vunpack.c.h.b16 %v1342
      %v1445 = vunpack.c.l.b16 %v1343
      %v1446 = vunpack.c.l.b16 %v1344
      %v1447 = vunpack.c.h.b16 %v1344
      %v1448 = vunpack.c.l.b16 %v1345
      %v1449 = vunpack.c.h.b16 %v1345
      %v1450 = vunpack.c.l.b16 %v1346
      %v1451 = vpack.c.b16 %v1436, %v1431
      %v1452 = vpack.c.b16 %v1437, %v1432
      %v1453 = vpack.c.b16 %v1438, %v1433
      %v1454 = vpack.c.b16 %v1439, %v1434
      %v1455 = vpack.c.b16 %v1440, %v1435
      %v1456 = vpack.c.b16 %v1446, %v1441
      %v1457 = vpack.c.b16 %v1447, %v1442
      %v1458 = vpack.c.b16 %v1448, %v1443
      %v1459 = vpack.c.b16 %v1449, %v1444
      %v1460 = vpack.c.b16 %v1450, %v1445
      %v1541 = vunpack.c.l.b16 %v1347
      %v1542 = vunpack.c.h.b16 %v1347
      %v1543 = vunpack.c.l.b16 %v1348
      %v1544 = vunpack.c.h.b16 %v1348
      %v1545 = vunpack.c.l.b16 %v1349
      %v1546 = vunpack.c.h.b16 %v1349
      %v1547 = vunpack.c.l.b16 %v1350
      %v1548 = vunpack.c.h.b16 %v1350
      %v1549 = vunpack.c.l.b16 %v1351
      %v1550 = vunpack.c.h.b16 %v1351
      %v1551 = vunpack.c.l.b16 %v1352
      %v1552 = vunpack.c.h.b16 %v1352
      %v1553 = vunpack.c.l.b16 %v1353
      %v1554 = vunpack.c.h.b16 %v1353
      %v1555 = vunpack.c.l.b16 %v1354
      %v1556 = vunpack.c.h.b16 %v1354
      %v1557 = vunpack.c.l.b16 %v1355
      %v1558 = vunpack.c.h.b16 %v1355
      %v1559 = vunpack.c.l.b16 %v1356
      %v1560 = vunpack.c.h.b16 %v1356
      %v1561 = vunpack.c.l.b16 %v1357
      %v1562 = vunpack.c.h.b16 %v1357
      %v1563 = vunpack.c.l.b16 %v1358
      %v1564 = vunpack.c.h.b16 %v1358
      %v1565 = vunpack.c.l.b16 %v1359
      %v1566 = vunpack.c.h.b16 %v1359
      %v1567 = vunpack.c.l.b16 %v1360
      %v1568 = vunpack.c.h.b16 %v1360
      %v1569 = vunpack.c.l.b16 %v1361
      %v1570 = vunpack.c.h.b16 %v1361
      %v1571 = vunpack.c.l.b16 %v1362
      %v1572 = vunpack.c.h.b16 %v1362
      %v1573 = vunpack.c.l.b16 %v1363
      %v1574 = vunpack.c.h.b16 %v1363
      %v1575 = vunpack.c.l.b16 %v1364
      %v1576 = vunpack.c.h.b16 %v1364
      %v1577 = vunpack.c.l.b16 %v1365
      %v1578 = vunpack.c.h.b16 %v1365
      %v1579 = vunpack.c.l.b16 %v1366
      %v1580 = vunpack.c.h.b16 %v1366
      %v1581 = vunpack.c.l.b16 %v1367
      %v1582 = vunpack.c.h.b16 %v1367
      %v1583 = vunpack.c.l.b16 %v1368
      %v1584 = vunpack.c.h.b16 %v1368
      %v1585 = vunpack.c.l.b16 %v1369
      %v1586 = vunpack.c.h.b16 %v1369
      %v1587 = vunpack.c.l.b16 %v1370
      %v1588 = vunpack.c.h.b16 %v1370
      %v1589 = vunpack.c.l.b16 %v1371
      %v1590 = vunpack.c.h.b16 %v1371
      %v1591 = vunpack.c.l.b16 %v1372
      %v1592 = vunpack.c.h.b16 %v1372
      %v1593 = vunpack.c.l.b16 %v1373
      %v1594 = vunpack.c.h.b16 %v1373
      %v1595 = vunpack.c.l.b16 %v1374
      %v1596 = vunpack.c.h.b16 %v1374
      %v1597 = vunpack.c.l.b16 %v1375
      %v1598 = vunpack.c.h.b16 %v1375
      %v1599 = vunpack.c.l.b16 %v1376
      %v1600 = vunpack.c.h.b16 %v1376
      %v1601 = vunpack.c.l.b16 %v1377
      %v1602 = vunpack.c.h.b16 %v1377
      %v1603 = vunpack.c.l.b16 %v1378
      %v1604 = vunpack.c.h.b16 %v1378
      %v1605 = vunpack.c.l.b16 %v1379
      %v1606 = vunpack.c.h.b16 %v1379
      %v1607 = vunpack.c.l.b16 %v1380
      %v1608 = vunpack.c.h.b16 %v1380
      %v1609 = vunpack.c.l.b16 %v1381
      %v1610 = vunpack.c.h.b16 %v1381
      %v1611 = vunpack.c.l.b16 %v1382
      %v1612 = vunpack.c.h.b16 %v1382
      %v1613 = vunpack.c.l.b16 %v1383
      %v1614 = vunpack.c.h.b16 %v1383
      %v1615 = vunpack.c.l.b16 %v1384
      %v1616 = vunpack.c.h.b16 %v1384
      %v1617 = vunpack.c.l.b16 %v1385
      %v1618 = vunpack.c.h.b16 %v1385
      %v1619 = vunpack.c.l.b16 %v1386
      %v1620 = vunpack.c.h.b16 %v1386
      %v1621 = vunpack.c.l.b16 %v1387
      %v1622 = vunpack.c.h.b16 %v1387
      %v1623 = vunpack.c.l.b16 %v1388
      %v1624 = vunpack.c.h.b16 %v1388
      %v1625 = vunpack.c.l.b16 %v1389
      %v1626 = vunpack.c.h.b16 %v1389
      %v1627 = vunpack.c.l.b16 %v1390
      %v1628 = vunpack.c.h.b16 %v1390
      %v1629 = vunpack.c.l.b16 %v1391
      %v1630 = vunpack.c.h.b16 %v1391
      %v1631 = vunpack.c.l.b16 %v1392
      %v1632 = vunpack.c.h.b16 %v1392
      %v1633 = vunpack.c.l.b16 %v1393
      %v1634 = vunpack.c.h.b16 %v1393
      %v1635 = vunpack.c.l.b16 %v1394
      %v1636 = vunpack.c.h.b16 %v1394
      %v1637 = vunpack.c.l.b16 %v1395
      %v1638 = vunpack.c.h.b16 %v1395
      %v1639 = vunpack.c.l.b16 %v1396
      %v1640 = vunpack.c.h.b16 %v1396
      %v1641 = vunpack.c.l.b16 %v1397
      %v1642 = vunpack.c.h.b16 %v1397
      %v1643 = vunpack.c.l.b16 %v1398
      %v1644 = vunpack.c.h.b16 %v1398
      %v1645 = vunpack.c.l.b16 %v1399
      %v1646 = vunpack.c.h.b16 %v1399
      %v1647 = vunpack.c.l.b16 %v1400
      %v1648 = vunpack.c.h.b16 %v1400
      %v1649 = vunpack.c.l.b16 %v1401
      %v1650 = vunpack.c.h.b16 %v1401
      %v1651 = vunpack.c.l.b16 %v1402
      %v1652 = vunpack.c.h.b16 %v1402
      %v1653 = vunpack.c.l.b16 %v1403
      %v1654 = vunpack.c.h.b16 %v1403
      %v1655 = vunpack.c.l.b16 %v1404
      %v1656 = vunpack.c.h.b16 %v1404
      %v1657 = vunpack.c.l.b16 %v1405
      %v1658 = vunpack.c.h.b16 %v1405
      %v1659 = vunpack.c.l.b16 %v1406
      %v1660 = vunpack.c.h.b16 %v1406
      %v1661 = vunpack.c.l.b16 %v1407
      %v1662 = vunpack.c.h.b16 %v1407
      %v1663 = vunpack.c.l.b16 %v1408
      %v1664 = vunpack.c.h.b16 %v1408
      %v1665 = vunpack.c.l.b16 %v1409
      %v1666 = vunpack.c.h.b16 %v1409
      %v1667 = vunpack.c.l.b16 %v1410
      %v1668 = vunpack.c.h.b16 %v1410
      %v1669 = vunpack.c.l.b16 %v1411
      %v1670 = vunpack.c.h.b16 %v1411
      %v1671 = vunpack.c.l.b16 %v1412
      %v1672 = vunpack.c.h.b16 %v1412
      %v1673 = vunpack.c.l.b16 %v1413
      %v1674 = vunpack.c.h.b16 %v1413
      %v1675 = vunpack.c.l.b16 %v1414
      %v1676 = vunpack.c.h.b16 %v1414
      %v1677 = vunpack.c.l.b16 %v1415
      %v1678 = vunpack.c.h.b16 %v1415
      %v1679 = vunpack.c.l.b16 %v1416
      %v1680 = vunpack.c.h.b16 %v1416
      %v1681 = vunpack.c.l.b16 %v1417
      %v1682 = vunpack.c.h.b16 %v1417
      %v1683 = vunpack.c.l.b16 %v1418
      %v1684 = vunpack.c.h.b16 %v1418
      %v1685 = vpack.c.b16 %v1543, %v1541
      %v1686 = vpack.c.b16 %v1544, %v1542
      %v1687 = vpack.c.b16 %v1547, %v1545
      %v1688 = vpack.c.b16 %v1548, %v1546
      %v1689 = vpack.c.b16 %v1551, %v1549
      %v1690 = vpack.c.b16 %v1552, %v1550
      %v1691 = vpack.c.b16 %v1555, %v1553
      %v1692 = vpack.c.b16 %v1556, %v1554
      %v1693 = vpack.c.b16 %v1559, %v1557
      %v1694 = vpack.c.b16 %v1560, %v1558
      %v1695 = vpack.c.b16 %v1563, %v1561
      %v1696 = vpack.c.b16 %v1564, %v1562
      %v1697 = vpack.c.b16 %v1567, %v1565
      %v1698 = vpack.c.b16 %v1568, %v1566
      %v1699 = vpack.c.b16 %v1571, %v1569
      %v1700 = vpack.c.b16 %v1572, %v1570
      %v1701 = vpack.c.b16 %v1575, %v1573
      %v1702 = vpack.c.b16 %v1576, %v1574
      %v1703 = vpack.c.b16 %v1579, %v1577
      %v1704 = vpack.c.b16 %v1580, %v1578
      %v1705 = vpack.c.b16 %v1583, %v1581
      %v1706 = vpack.c.b16 %v1584, %v1582
      %v1707 = vpack.c.b16 %v1587, %v1585
      %v1708 = vpack.c.b16 %v1588, %v1586
      %v1709 = vpack.c.b16 %v1591, %v1589
      %v1710 = vpack.c.b16 %v1592, %v1590
      %v1711 = vpack.c.b16 %v1595, %v1593
      %v1712 = vpack.c.b16 %v1596, %v1594
      %v1713 = vpack.c.b16 %v1599, %v1597
      %v1714 = vpack.c.b16 %v1600, %v1598
      %v1715 = vpack.c.b16 %v1603, %v1601
      %v1716 = vpack.c.b16 %v1604, %v1602
      %v1717 = vpack.c.b16 %v1607, %v1605
      %v1718 = vpack.c.b16 %v1608, %v1606
      %v1719 = vpack.c.b16 %v1611, %v1609
      %v1720 = vpack.c.b16 %v1612, %v1610
      %v1721 = vpack.c.b16 %v1615, %v1613
      %v1722 = vpack.c.b16 %v1616, %v1614
      %v1723 = vpack.c.b16 %v1619, %v1617
      %v1724 = vpack.c.b16 %v1620, %v1618
      %v1725 = vpack.c.b16 %v1623, %v1621
      %v1726 = vpack.c.b16 %v1624, %v1622
      %v1727 = vpack.c.b16 %v1627, %v1625
      %v1728 = vpack.c.b16 %v1628, %v1626
      %v1729 = vpack.c.b16 %v1631, %v1629
      %v1730 = vpack.c.b16 %v1632, %v1630
      %v1731 = vpack.c.b16 %v1635, %v1633
      %v1732 = vpack.c.b16 %v1636, %v1634
      %v1733 = vpack.c.b16 %v1639, %v1637
      %v1734 = vpack.c.b16 %v1640, %v1638
      %v1735 = vpack.c.b16 %v1643, %v1641
      %v1736 = vpack.c.b16 %v1644, %v1642
      %v1737 = vpack.c.b16 %v1647, %v1645
      %v1738 = vpack.c.b16 %v1648, %v1646
      %v1739 = vpack.c.b16 %v1651, %v1649
      %v1740 = vpack.c.b16 %v1652, %v1650
      %v1741 = vpack.c.b16 %v1655, %v1653
      %v1742 = vpack.c.b16 %v1656, %v1654
      %v1743 = vpack.c.b16 %v1659, %v1657
      %v1744 = vpack.c.b16 %v1660, %v1658
      %v1745 = vpack.c.b16 %v1663, %v1661
      %v1746 = vpack.c.b16 %v1664, %v1662
      %v1747 = vpack.c.b16 %v1667, %v1665
      %v1748 = vpack.c.b16 %v1668, %v1666
      %v1749 = vpack.c.b16 %v1671, %v1669
      %v1750 = vpack.c.b16 %v1672, %v1670
      %v1751 = vpack.c.b16 %v1675, %v1673
      %v1752 = vpack.c.b16 %v1676, %v1674
      %v1753 = vpack.c.b16 %v1679, %v1677
      %v1754 = vpack.c.b16 %v1680, %v1678
      %v1755 = vpack.c.b16 %v1683, %v1681
      %v1756 = vpack.c.b16 %v1684, %v1682
      %vm1829 = vcmask 523264
      %v1831 = vsel %vm1829, %v1455, 0
      %v1834 = vsel %vm1829, %v1460, 0
      %1836 = vmatpush.bf16.msra.mxu0 %v1699
      %1837 = vmatpush.bf16.msra.mxu0 %v1697
      %1838 = vmatpush.bf16.msra.mxu0 %v1695
      %1839 = vmatpush.bf16.msra.mxu0 %v1693
      %1840 = vmatpush.bf16.msra.mxu0 %v1691
      %1841 = vmatpush.bf16.msra.mxu0 %v1689
      %1842 = vmatpush.bf16.msra.mxu0 %v1687
      %1843 = vmatpush.bf16.msra.mxu0 %v1685
      %1844 = vmatmul.bf16.gmra.mxu0 %v1451
      %v1845 = vpop.f32.mrf.mxu0
      %v1846 = vadd.f32 0.0, %v1845
      %v1847 = vpop.f32.mrf.mxu0
      %v1848 = vadd.f32 0.0, %v1847
      %1849 = vmatmul.bf16.gmra.mxu0 %v1456
      %v1850 = vpop.f32.mrf.mxu0
      %v1851 = vadd.f32 0.0, %v1850
      %v1852 = vpop.f32.mrf.mxu0
      %v1853 = vadd.f32 0.0, %v1852
      %1854 = vdwg.mxu0
      %1855 = vmatpush.bf16.msra.mxu0 %v1715
      %1856 = vmatpush.bf16.msra.mxu0 %v1713
      %1857 = vmatpush.bf16.msra.mxu0 %v1711
      %1858 = vmatpush.bf16.msra.mxu0 %v1709
      %1859 = vmatpush.bf16.msra.mxu0 %v1707
      %1860 = vmatpush.bf16.msra.mxu0 %v1705
      %1861 = vmatpush.bf16.msra.mxu0 %v1703
      %1862 = vmatpush.bf16.msra.mxu0 %v1701
      %1863 = vmatmul.bf16.gmra.mxu0 %v1452
      %v1864 = vpop.f32.mrf.mxu0
      %v1865 = vadd.f32 %v1846, %v1864
      %v1866 = vpop.f32.mrf.mxu0
      %v1867 = vadd.f32 %v1848, %v1866
      %1868 = vmatmul.bf16.gmra.mxu0 %v1457
      %v1869 = vpop.f32.mrf.mxu0
      %v1870 = vadd.f32 %v1851, %v1869
      %v1871 = vpop.f32.mrf.mxu0
      %v1872 = vadd.f32 %v1853, %v1871
      %1873 = vdwg.mxu0
      %1874 = vmatpush.bf16.msra.mxu0 %v1731
      %1875 = vmatpush.bf16.msra.mxu0 %v1729
      %1876 = vmatpush.bf16.msra.mxu0 %v1727
      %1877 = vmatpush.bf16.msra.mxu0 %v1725
      %1878 = vmatpush.bf16.msra.mxu0 %v1723
      %1879 = vmatpush.bf16.msra.mxu0 %v1721
      %1880 = vmatpush.bf16.msra.mxu0 %v1719
      %1881 = vmatpush.bf16.msra.mxu0 %v1717
      %1882 = vmatmul.bf16.gmra.mxu0 %v1453
      %v1883 = vpop.f32.mrf.mxu0
      %v1884 = vadd.f32 %v1865, %v1883
      %v1885 = vpop.f32.mrf.mxu0
      %v1886 = vadd.f32 %v1867, %v1885
      %1887 = vmatmul.bf16.gmra.mxu0 %v1458
      %v1888 = vpop.f32.mrf.mxu0
      %v1889 = vadd.f32 %v1870, %v1888
      %v1890 = vpop.f32.mrf.mxu0
      %v1891 = vadd.f32 %v1872, %v1890
      %1892 = vdwg.mxu0
      %1893 = vmatpush.bf16.msra.mxu0 %v1747
      %1894 = vmatpush.bf16.msra.mxu0 %v1745
      %1895 = vmatpush.bf16.msra.mxu0 %v1743
      %1896 = vmatpush.bf16.msra.mxu0 %v1741
      %1897 = vmatpush.bf16.msra.mxu0 %v1739
      %1898 = vmatpush.bf16.msra.mxu0 %v1737
      %1899 = vmatpush.bf16.msra.mxu0 %v1735
      %1900 = vmatpush.bf16.msra.mxu0 %v1733
      %1901 = vmatmul.bf16.gmra.mxu0 %v1454
      %v1902 = vpop.f32.mrf.mxu0
      %v1903 = vadd.f32 %v1884, %v1902
      %v1904 = vpop.f32.mrf.mxu0
      %v1905 = vadd.f32 %v1886, %v1904
      %1906 = vmatmul.bf16.gmra.mxu0 %v1459
      %v1907 = vpop.f32.mrf.mxu0
      %v1908 = vadd.f32 %v1889, %v1907
      %v1909 = vpop.f32.mrf.mxu0
      %v1910 = vadd.f32 %v1891, %v1909
      %1911 = vdwg.mxu0
      %1912 = vmatpush.bf16.msra.mxu0 0
      %1913 = vmatpush.bf16.msra.mxu0 0
      %1914 = vmatpush.bf16.msra.mxu0 0
      %1915 = vmatpush.bf16.msra.mxu0 0
      %1916 = vmatpush.bf16.msra.mxu0 %v1755
      %1917 = vmatpush.bf16.msra.mxu0 %v1753
      %1918 = vmatpush.bf16.msra.mxu0 %v1751
      %1919 = vmatpush.bf16.msra.mxu0 %v1749
      %1920 = vmatmul.bf16.gmra.mxu0 %v1831
      %v1921 = vpop.f32.mrf.mxu0
      %v1922 = vadd.f32 %v1903, %v1921
      %v1923 = vpop.f32.mrf.mxu0
      %v1924 = vadd.f32 %v1905, %v1923
      %1925 = vmatmul.bf16.gmra.mxu0 %v1834
      %v1926 = vpop.f32.mrf.mxu0
      %v1927 = vadd.f32 %v1908, %v1926
      %v1928 = vpop.f32.mrf.mxu0
      %v1929 = vadd.f32 %v1910, %v1928
      %1930 = vdwg.mxu0
      %1931 = vmatpush.bf16.msra.mxu0 %v1700
      %1932 = vmatpush.bf16.msra.mxu0 %v1698
      %1933 = vmatpush.bf16.msra.mxu0 %v1696
      %1934 = vmatpush.bf16.msra.mxu0 %v1694
      %1935 = vmatpush.bf16.msra.mxu0 %v1692
      %1936 = vmatpush.bf16.msra.mxu0 %v1690
      %1937 = vmatpush.bf16.msra.mxu0 %v1688
      %1938 = vmatpush.bf16.msra.mxu0 %v1686
      %1939 = vmatmul.bf16.gmra.mxu0 %v1451
      %v1940 = vpop.f32.mrf.mxu0
      %v1941 = vadd.f32 0.0, %v1940
      %v1942 = vpop.f32.mrf.mxu0
      %v1943 = vadd.f32 0.0, %v1942
      %1944 = vmatmul.bf16.gmra.mxu0 %v1456
      %v1945 = vpop.f32.mrf.mxu0
      %v1946 = vadd.f32 0.0, %v1945
      %v1947 = vpop.f32.mrf.mxu0
      %v1948 = vadd.f32 0.0, %v1947
      %1949 = vdwg.mxu0
      %1950 = vmatpush.bf16.msra.mxu0 %v1716
      %1951 = vmatpush.bf16.msra.mxu0 %v1714
      %1952 = vmatpush.bf16.msra.mxu0 %v1712
      %1953 = vmatpush.bf16.msra.mxu0 %v1710
      %1954 = vmatpush.bf16.msra.mxu0 %v1708
      %1955 = vmatpush.bf16.msra.mxu0 %v1706
      %1956 = vmatpush.bf16.msra.mxu0 %v1704
      %1957 = vmatpush.bf16.msra.mxu0 %v1702
      %1958 = vmatmul.bf16.gmra.mxu0 %v1452
      %v1959 = vpop.f32.mrf.mxu0
      %v1960 = vadd.f32 %v1941, %v1959
      %v1961 = vpop.f32.mrf.mxu0
      %v1962 = vadd.f32 %v1943, %v1961
      %1963 = vmatmul.bf16.gmra.mxu0 %v1457
      %v1964 = vpop.f32.mrf.mxu0
      %v1965 = vadd.f32 %v1946, %v1964
      %v1966 = vpop.f32.mrf.mxu0
      %v1967 = vadd.f32 %v1948, %v1966
      %1968 = vdwg.mxu0
      %1969 = vmatpush.bf16.msra.mxu0 %v1732
      %1970 = vmatpush.bf16.msra.mxu0 %v1730
      %1971 = vmatpush.bf16.msra.mxu0 %v1728
      %1972 = vmatpush.bf16.msra.mxu0 %v1726
      %1973 = vmatpush.bf16.msra.mxu0 %v1724
      %1974 = vmatpush.bf16.msra.mxu0 %v1722
      %1975 = vmatpush.bf16.msra.mxu0 %v1720
      %1976 = vmatpush.bf16.msra.mxu0 %v1718
      %1977 = vmatmul.bf16.gmra.mxu0 %v1453
      %v1978 = vpop.f32.mrf.mxu0
      %v1979 = vadd.f32 %v1960, %v1978
      %v1980 = vpop.f32.mrf.mxu0
      %v1981 = vadd.f32 %v1962, %v1980
      %1982 = vmatmul.bf16.gmra.mxu0 %v1458
      %v1983 = vpop.f32.mrf.mxu0
      %v1984 = vadd.f32 %v1965, %v1983
      %v1985 = vpop.f32.mrf.mxu0
      %v1986 = vadd.f32 %v1967, %v1985
      %1987 = vdwg.mxu0
      %1988 = vmatpush.bf16.msra.mxu0 %v1748
      %1989 = vmatpush.bf16.msra.mxu0 %v1746
      %1990 = vmatpush.bf16.msra.mxu0 %v1744
      %1991 = vmatpush.bf16.msra.mxu0 %v1742
      %1992 = vmatpush.bf16.msra.mxu0 %v1740
      %1993 = vmatpush.bf16.msra.mxu0 %v1738
      %1994 = vmatpush.bf16.msra.mxu0 %v1736
      %1995 = vmatpush.bf16.msra.mxu0 %v1734
      %1996 = vmatmul.bf16.gmra.mxu0 %v1454
      %v1997 = vpop.f32.mrf.mxu0
      %v1998 = vadd.f32 %v1979, %v1997
      %v1999 = vpop.f32.mrf.mxu0
      %v2000 = vadd.f32 %v1981, %v1999
      %2001 = vmatmul.bf16.gmra.mxu0 %v1459
      %v2002 = vpop.f32.mrf.mxu0
      %v2003 = vadd.f32 %v1984, %v2002
      %v2004 = vpop.f32.mrf.mxu0
      %v2005 = vadd.f32 %v1986, %v2004
      %2006 = vdwg.mxu0
      %2007 = vmatpush.bf16.msra.mxu0 0
      %2008 = vmatpush.bf16.msra.mxu0 0
      %2009 = vmatpush.bf16.msra.mxu0 0
      %2010 = vmatpush.bf16.msra.mxu0 0
      %2011 = vmatpush.bf16.msra.mxu0 %v1756
      %2012 = vmatpush.bf16.msra.mxu0 %v1754
      %2013 = vmatpush.bf16.msra.mxu0 %v1752
      %2014 = vmatpush.bf16.msra.mxu0 %v1750
      %2015 = vmatmul.bf16.gmra.mxu0 %v1831
      %v2016 = vpop.f32.mrf.mxu0
      %v2017 = vadd.f32 %v1998, %v2016
      %v2018 = vpop.f32.mrf.mxu0
      %v2019 = vadd.f32 %v2000, %v2018
      %2020 = vmatmul.bf16.gmra.mxu0 %v1834
      %v2021 = vpop.f32.mrf.mxu0
      %v2022 = vadd.f32 %v2003, %v2021
      %v2023 = vpop.f32.mrf.mxu0
      %v2024 = vadd.f32 %v2005, %v2023
      %2025 = vdwg.mxu0
      %v2026 = vld [vmem:[%s2] sm:$0xff]
      %v2027 = vld [vmem:[%s2 + $0x8] sm:$0xff]
      %v2028 = vld [vmem:[%s2 + $0x10] sm:$0xff]
      %v2029 = vld [vmem:[%s2 + $0x18] sm:$0xff]
      %2031 = vset.pattern.permute.xlu0 0
      %2032 = vperm.xlu0 %2031, %v2026
      %v2033 = vpop.permute.xlu0 %2032
      %2036 = vset.pattern.permute.xlu0 0
      %2037 = vperm.xlu0 %2036, %v2027
      %v2038 = vpop.permute.xlu0 %2037
      %2041 = vset.pattern.permute.xlu0 0
      %2042 = vperm.xlu0 %2041, %v2028
      %v2043 = vpop.permute.xlu0 %2042
      %2046 = vset.pattern.permute.xlu0 0
      %2047 = vperm.xlu0 %2046, %v2029
      %v2048 = vpop.permute.xlu0 %2047
      %v2050 = vmul.f32 %v1922, %v2033
      %v2051 = vmul.f32 %v2017, %v2033
      %v2052 = vmul.f32 %v1924, %v2038
      %v2053 = vmul.f32 %v2019, %v2038
      %v2054 = vmul.f32 %v1927, %v2043
      %v2055 = vmul.f32 %v2022, %v2043
      %v2056 = vmul.f32 %v1929, %v2048
      %v2057 = vmul.f32 %v2024, %v2048
      %v2058 = vld [vmem:[%s3] sm:$0xff]
      %v2059 = vld [vmem:[%s3 + $0x8] sm:$0xff]
      %v2060 = vld [vmem:[%s3 + $0x10] sm:$0xff]
      %v2061 = vld [vmem:[%s3 + $0x18] sm:$0xff]
      %2063 = vset.pattern.permute.xlu0 0
      %2064 = vperm.xlu0 %2063, %v2058
      %v2065 = vpop.permute.xlu0 %2064
      %2068 = vset.pattern.permute.xlu0 0
      %2069 = vperm.xlu0 %2068, %v2059
      %v2070 = vpop.permute.xlu0 %2069
      %2073 = vset.pattern.permute.xlu0 0
      %2074 = vperm.xlu0 %2073, %v2060
      %v2075 = vpop.permute.xlu0 %2074
      %2078 = vset.pattern.permute.xlu0 0
      %2079 = vperm.xlu0 %2078, %v2061
      %v2080 = vpop.permute.xlu0 %2079
      %v2082 = vadd.f32 %v2050, %v2065
      %v2083 = vadd.f32 %v2051, %v2065
      %v2084 = vadd.f32 %v2052, %v2070
      %v2085 = vadd.f32 %v2053, %v2070
      %v2086 = vadd.f32 %v2054, %v2075
      %v2087 = vadd.f32 %v2055, %v2075
      %v2088 = vadd.f32 %v2056, %v2080
      %v2089 = vadd.f32 %v2057, %v2080
      %v2090 = vmax.f32 %v2082, 0.0
      %v2091 = vmax.f32 %v2083, 0.0
      %v2092 = vmax.f32 %v2084, 0.0
      %v2093 = vmax.f32 %v2085, 0.0
      %v2094 = vmax.f32 %v2086, 0.0
      %v2095 = vmax.f32 %v2087, 0.0
      %v2096 = vmax.f32 %v2088, 0.0
      %v2097 = vmax.f32 %v2089, 0.0
      %v2098 = vld [vmem:[%s4] sm:$0xff]
      %vm2099 = vcmask 261120
      %v2101 = vsel %vm2099, %v2098, 0
      %2103 = vmatpush.msra.mxu0 0.0
      %2104 = vmatpush.msra.mxu0 0.0
      %2105 = vmatpush.msra.mxu0 0.0
      %2106 = vmatpush.msra.mxu0 0.0
      %2107 = vmatpush.msra.mxu0 0.0
      %2108 = vmatpush.msra.mxu0 0.0
      %2109 = vmatpush.msra.mxu0 0.0
      %2110 = vmatpush.msra.mxu0 0.0
      %2111 = vmatpush.msra.mxu0 0.0
      %2112 = vmatpush.msra.mxu0 0.0
      %2113 = vmatpush.msra.mxu0 0.0
      %2114 = vmatpush.msra.mxu0 0.0
      %2115 = vmatpush.msra.mxu0 %v2096
      %2116 = vmatpush.msra.mxu0 %v2094
      %2117 = vmatpush.msra.mxu0 %v2092
      %2118 = vmatpush.msra.mxu0 %v2090
      %2119 = vmatmul.f32.gmra.mxu0 %v2101
      %v2120 = vpop.f32.mrf.mxu0
      %v2121 = vadd.f32 0.0, %v2120
      %2122 = vdwg.mxu0
      %2123 = vmatpush.msra.mxu0 0.0
      %2124 = vmatpush.msra.mxu0 0.0
      %2125 = vmatpush.msra.mxu0 0.0
      %2126 = vmatpush.msra.mxu0 0.0
      %2127 = vmatpush.msra.mxu0 0.0
      %2128 = vmatpush.msra.mxu0 0.0
      %2129 = vmatpush.msra.mxu0 0.0
      %2130 = vmatpush.msra.mxu0 0.0
      %2131 = vmatpush.msra.mxu0 0.0
      %2132 = vmatpush.msra.mxu0 0.0
      %2133 = vmatpush.msra.mxu0 0.0
      %2134 = vmatpush.msra.mxu0 0.0
      %2135 = vmatpush.msra.mxu0 %v2097
      %2136 = vmatpush.msra.mxu0 %v2095
      %2137 = vmatpush.msra.mxu0 %v2093
      %2138 = vmatpush.msra.mxu0 %v2091
      %2139 = vmatmul.f32.gmra.mxu0 %v2101
      %v2140 = vpop.f32.mrf.mxu0
      %v2141 = vadd.f32 0.0, %v2140
      %2142 = vdwg.mxu0
      %v2143 = vld [vmem:[%s5] sm:$0xff]
      %2145 = vset.pattern.permute.xlu0 0
      %2146 = vperm.xlu0 %2145, %v2143
      %v2147 = vpop.permute.xlu0 %2146
      %v2149 = vmul.f32 %v2121, %v2147
      %v2150 = vmul.f32 %v2141, %v2147
      %v2151 = vld [vmem:[%s6] sm:$0xff]
      %2153 = vset.pattern.permute.xlu0 0
      %2154 = vperm.xlu0 %2153, %v2151
      %v2155 = vpop.permute.xlu0 %2154
      %v2157 = vadd.f32 %v2149, %v2155
      %v2158 = vadd.f32 %v2150, %v2155
      %v2159 = vmax.f32 %v2157, 0.0
      %v2160 = vmax.f32 %v2158, 0.0
      %v2161 = vpack.c.bf16 %v2160, %v2159
      %2162 = vst [vmem:[%s300] sm:$0xff] %v2161
      %s2163 = smul.u32 2, %s23
      %p2164 = scmp.lt.s32.totalorder %s22, 1
      %s2165 = scalar_select %p2164, %s22, 1
      %p2166 = scmp.lt.s32.totalorder %s2163, 5
      %s2167 = scalar_select %p2166, %s2163, 5
      %s2168 = smul.addr %s2165, 6
      %s2169 = sadd.s32 %s2167, %s2168
      %s2170 = smul.addr %s2169, 4
      %s2171 = scalar_lea.vmem %s7, %s2170
      // Predicated region
      $region49: #{encode_asp_forward.1} parent=47 // pred_check
        %p2172 = pneg %p202
      $region50: #{encode_asp_forward.1} parent=47 // pred_check_branch
        %2174 = sbr.rel (%p2172) target = $region52
      $region51: #{encode_asp_forward.1} parent=47 // pred_region
        %s2175 = smul.u32 2, %s23
      $region52: #{encode_asp_forward.1} parent=47 // pred_fallthru
        _
    $region48: #{encode_asp_forward.1} parent=5 // pred_fallthru
      _
    %p2176 = scmp.le.s32.totalorder 2, %s13
    // Predicated region
    $region53: #{encode_asp_forward.1} parent=5 // pred_check
      %p2177 = pneg %p2176
    $region54: #{encode_asp_forward.1} parent=5 // pred_check_branch
      %2179 = sbr.rel (%p2177) target = $region56
    $region55: #{encode_asp_forward.1} parent=5 // pred_region
      %s2180 = ssub.s32 %s13, 2
      // Predicated region
      $region57: #{encode_asp_forward.1} parent=55 // pred_check
        %p2181 = pneg %p208
      $region58: #{encode_asp_forward.1} parent=55 // pred_check_branch
        %2183 = sbr.rel (%p2181) target = $region60
      $region59: #{encode_asp_forward.1} parent=55 // pred_region
        %s2184 = smul.u32 2, %s25
        %p2185 = scmp.lt.s32.totalorder %s24, 1
        %s2186 = scalar_select %p2185, %s24, 1
        %p2187 = scmp.lt.s32.totalorder %s2184, 5
        %s2188 = scalar_select %p2187, %s2184, 5
        %s2189 = smul.addr %s2186, 6
        %s2190 = sadd.s32 %s2188, %s2189
        %s2191 = smul.addr %s2190, 4
        %s2192 = scalar_lea.vmem %s7, %s2191
      $region60: #{encode_asp_forward.1} parent=55 // pred_fallthru
        _
    $region56: #{encode_asp_forward.1} parent=5 // pred_fallthru
      _
  $region6: #{encode_asp_forward.1} parent=0 // loop_footer
    %s17 = sadd.s32 1, %s13
  $region7: #{encode_asp_forward.1} parent=0 // loop_footer_branch
    %12 = sbr.rel target = $region3
  $region8: #{encode_asp_forward.1} parent=0 // loop_exit
    _

</llo_original>
